<compile_context>
chip_gen: v7x
topology: tpu7x:2x2x1
jax: 0.10.0
libtpu: 0.0.40
codegen_flags: <defaults>
</compile_context>

<pallas_src>
import functools

import numpy as np
import jax
import jax.numpy as jnp
from jax import lax
from jax.experimental import pallas as pl
from jax.experimental.pallas import tpu as pltpu

NEG_INF = -10000.0


def _round_up(x, m):
    return ((x + m - 1) // m) * m


# ---------------------------------------------------------------------------
# Parameter construction (mirrors CRF.__init__ / _initialize_parameters)
# ---------------------------------------------------------------------------
TAG_LIST = ['<pad>', '<start>', 'O',
            'B-Pd', 'I-Pd', 'E-Pd', 'S-Pd', 'B-Fm', 'I-Fm', 'E-Fm', 'S-Fm',
            'B-Co', 'I-Co', 'E-Co', 'S-Co', 'B-Fe', 'I-Fe', 'E-Fe', 'S-Fe',
            'B-Df', 'I-Df', 'E-Df', 'S-Df', 'B-Pf', 'I-Pf', 'E-Pf', 'S-Pf',
            'B-Pr', 'I-Pr', 'E-Pr', 'S-Pr', 'B-Td1', 'I-Td1', 'E-Td1', 'S-Td1',
            'B-Ed', 'I-Ed', 'E-Ed', 'S-Ed', 'B-Wd', 'I-Wd', 'E-Wd', 'S-Wd',
            'B-Dd', 'I-Dd', 'E-Dd', 'S-Dd', 'B-Td2', 'I-Td2', 'E-Td2', 'S-Td2',
            'B-Wo', 'I-Wo', 'E-Wo', 'S-Wo', 'B-Ws', 'I-Ws', 'E-Ws', 'S-Ws',
            'B-Ma', 'I-Ma', 'E-Ma', 'S-Ma', '<eos>']


def build_transitions(target_size, key):
    """Deterministic init: uniform(-0.1, 0.1) + special-tag + BIOES constraints."""
    start_idx, end_idx, pad_idx = 1, target_size - 1, 0
    trans = np.array(
        jax.random.uniform(key, (target_size, target_size),
                           minval=-0.1, maxval=0.1, dtype=jnp.float32))
    trans[:, start_idx] = NEG_INF
    trans[end_idx, :] = NEG_INF
    trans[pad_idx, :] = NEG_INF
    trans[:, pad_idx] = NEG_INF
    trans[pad_idx, pad_idx] = 0.0

    IMPOSSIBLE = -1000.0
    for i, from_tag in enumerate(TAG_LIST):
        for j, to_tag in enumerate(TAG_LIST):
            if i >= target_size or j >= target_size:
                continue
            from_prefix = from_tag.split('-')[0] if '-' in from_tag else from_tag
            to_prefix = to_tag.split('-')[0] if '-' in to_tag else to_tag
            from_type = from_tag.split('-')[1] if '-' in from_tag else ''
            to_type = to_tag.split('-')[1] if '-' in to_tag else ''
            if from_prefix == 'B':
                if to_prefix in ['I', 'E']:
                    if from_type != to_type:
                        trans[i, j] = IMPOSSIBLE
                elif to_prefix not in ['O', 'B', 'S', '<eos>']:
                    trans[i, j] = IMPOSSIBLE
            elif from_prefix == 'I':
                if to_prefix in ['I', 'E']:
                    if from_type != to_type:
                        trans[i, j] = IMPOSSIBLE
                elif to_prefix not in ['O', 'B', 'S', '<eos>']:
                    trans[i, j] = IMPOSSIBLE
            elif from_prefix == 'E':
                if to_prefix in ['I', 'E']:
                    trans[i, j] = IMPOSSIBLE
            elif from_prefix == 'S':
                if to_prefix in ['I', 'E']:
                    trans[i, j] = IMPOSSIBLE
            elif from_tag == '<start>':
                if to_prefix in ['I', 'E']:
                    trans[i, j] = IMPOSSIBLE
            elif from_tag == 'O':
                if to_prefix in ['I', 'E']:
                    trans[i, j] = IMPOSSIBLE
            if to_tag == '<eos>':
                if from_prefix in ['B', 'I']:
                    trans[i, j] = IMPOSSIBLE
    return jnp.asarray(trans, dtype=jnp.float32)


# ---------------------------------------------------------------------------
# Pallas kernel: one grid step == one (batch element, block of TS time steps).
# ---------------------------------------------------------------------------
def viterbi_kernel(len_ref, feats_ref, trans_ref, trans_end_ref,
                   bptr_ref, score_ref, tag_ref, vvars_ref,
                   *, start_idx, ts):
    b = pl.program_id(0)                      # batch index (Bb == 1, parallel)
    tb = pl.program_id(1)                     # time-block index (serial axis)
    n_tb = pl.num_programs(1)
    Bb, Tpad = vvars_ref.shape
    T_r = trans_ref.shape[0]                  # real (sublane-padded) prev tags
    length = len_ref[b]                       # scalar seq length from SMEM

    # init viterbi variables at the first time block of each batch element
    @pl.when(tb == 0)
    def _init():
        col = lax.broadcasted_iota(jnp.int32, (Bb, Tpad), 1)
        vvars_ref[...] = jnp.where(col == start_idx, 0.0, NEG_INF).astype(jnp.float32)

    # loop invariants, hoisted out of the serial time loop
    trans3 = trans_ref[...][None, :, :]                           # (1, T_r, Tpad)
    prev_iota = lax.broadcasted_iota(jnp.int32, (Bb, T_r, Tpad), 1)
    t_base = tb * ts

    n_groups = ts // 8

    def group_body(g, vvars):
        base = pl.multiple_of(g * 8, 8)
        emit8 = feats_ref[:, pl.ds(base, 8), :]                   # (Bb, 8, Tpad)
        rows = []
        for k in range(8):                                        # fully unrolled
            # ntv[b, prev, next] = vvars[b, prev] + transitions[prev, next]
            # TODO(synk): the vvars lane->sublane relayout per step is inherent
            # to the single-row recurrence; it is halved here by slicing prev
            # to T_r real tags.
            ntv = vvars[:, :T_r, None] + trans3                   # (Bb, T_r, Tpad)
            best_val = jnp.max(ntv, axis=1)                       # (Bb, Tpad)
            # first-occurrence argmax over the prev-tag axis
            best_prev = jnp.min(
                jnp.where(ntv == best_val[:, None, :], prev_iota, T_r),
                axis=1).astype(jnp.int32)                         # (Bb, Tpad)
            rows.append(best_prev)
            vnew = best_val + emit8[:, k, :]
            valid = (t_base + base + k) < length                  # scalar compare
            vvars = jnp.where(valid, vnew, vvars)                 # masked update
        # one aligned 8-row, lane-dense store per group
        bptr_ref[:, pl.ds(base, 8), :] = jnp.stack(rows, axis=1)
        return vvars

    vvars = lax.fori_loop(0, n_groups, group_body, vvars_ref[...])
    vvars_ref[...] = vvars                    # flush once per time block

    # terminal step: add transition to END tag, take max / first-occurrence argmax
    @pl.when(tb == n_tb - 1)
    def _finalize():
        term = vvars + trans_end_ref[...]                         # (Bb, Tpad)
        tmax = jnp.max(term, axis=1, keepdims=True)               # (Bb, 1)
        tag_iota = lax.broadcasted_iota(jnp.int32, (Bb, Tpad), 1)
        best_tag = jnp.min(jnp.where(term == tmax, tag_iota, Tpad),
                           axis=1, keepdims=True).astype(jnp.int32)
        score_ref[...] = tmax[:, :, None]                         # (Bb, 1, 1)
        tag_ref[...] = best_tag[:, :, None]                       # (Bb, 1, 1)


def crf_viterbi_pallas(feats_bst, lengths, transitions,
                       start_idx=1, end_idx=None):
    """feats_bst: (B, S, T) f32; lengths: (B,) int; transitions: (T, T) f32."""
    B, S, T = feats_bst.shape
    if end_idx is None:
        end_idx = T - 1

    LANE = 128
    Tpad = _round_up(T, LANE)                  # lane-dense next-tag axis
    T_r = _round_up(T, 8)                      # prev-tag axis: real tags only
    TS = min(512, _round_up(S, 8))             # time steps per grid block
    S_pad = _round_up(S, TS)
    Bb = 1                                     # batch block (parallel axis)

    # Pad tags with NEG_INF (padded tags never win a max); padded time steps
    # have validity False so vvars is unchanged there.
    feats_p = jnp.pad(feats_bst.astype(jnp.float32),
                      ((0, 0), (0, S_pad - S), (0, Tpad - T)),
                      constant_values=NEG_INF)
    trans = transitions.astype(jnp.float32)
    trans_prev = jnp.pad(trans, ((0, T_r - T), (0, Tpad - T)),
                         constant_values=NEG_INF)                 # (T_r, Tpad)
    trans_end = jnp.pad(trans[:, end_idx], (0, Tpad - T),
                        constant_values=NEG_INF)[None, :]         # (1, Tpad)
    lengths = jnp.asarray(lengths).astype(jnp.int32)              # (B,) SMEM prefetch

    kernel = functools.partial(viterbi_kernel, start_idx=start_idx, ts=TS)

    out_shapes = (
        jax.ShapeDtypeStruct((B, S_pad, Tpad), jnp.int32),   # backpointers
        jax.ShapeDtypeStruct((B, 1, 1), jnp.float32),        # best path scores
        jax.ShapeDtypeStruct((B, 1, 1), jnp.int32),          # best terminal tag
    )

    grid_spec = pltpu.PrefetchScalarGridSpec(
        num_scalar_prefetch=1,
        grid=(B // Bb, S_pad // TS),
        in_specs=[
            pl.BlockSpec((Bb, TS, Tpad), lambda b, t, lens: (b, t, 0)),  # feats
            pl.BlockSpec((T_r, Tpad), lambda b, t, lens: (0, 0)),        # transitions
            pl.BlockSpec((1, Tpad), lambda b, t, lens: (0, 0)),          # trans[:, END]
        ],
        out_specs=[
            pl.BlockSpec((Bb, TS, Tpad), lambda b, t, lens: (b, t, 0)),  # backptrs
            pl.BlockSpec((Bb, 1, 1), lambda b, t, lens: (b, 0, 0)),      # scores
            pl.BlockSpec((Bb, 1, 1), lambda b, t, lens: (b, 0, 0)),      # best tag
        ],
        scratch_shapes=[pltpu.VMEM((Bb, Tpad), jnp.float32)],            # viterbi vars
    )

    bptrs, scores, best_tag = pl.pallas_call(
        kernel,
        out_shape=out_shapes,
        grid_spec=grid_spec,
        compiler_params=pltpu.CompilerParams(
            dimension_semantics=("parallel", "arbitrary")),
    )(lengths, feats_p, trans_prev, trans_end)

    return bptrs[:, :S, :], scores[:, 0, 0], best_tag[:, 0, 0]


# ---------------------------------------------------------------------------
# On-device backtrace: only (B, S) paths + scalars leave the device.
# ---------------------------------------------------------------------------
@jax.jit
def viterbi_backtrace_device(bptrs, lengths, best_tag):
    """bptrs: (B, S, Tpad) int32; lengths: (B,) int32; best_tag: (B,) int32."""
    B, S, _ = bptrs.shape

    def step(carry, t):
        cur = jnp.where(t == lengths - 1, best_tag, carry)        # tag at position t
        bp_t = lax.dynamic_index_in_dim(bptrs, t, axis=1, keepdims=False)  # (B, Tpad)
        prev = jnp.take_along_axis(bp_t, cur[:, None], axis=1)[:, 0]
        new_carry = jnp.where(t <= lengths - 1, prev, cur)
        return new_carry, cur

    pre_tag, tags_rev = lax.scan(step, best_tag, jnp.arange(S - 1, -1, -1))
    path_tags = jnp.flip(tags_rev, axis=0).T                       # (B, S)
    return path_tags, pre_tag


def crf_forward(feats_bst, mask_bs, transitions, start_idx=1):
    """Full CRF.forward semantics: returns (best_path_scores, best_paths list)."""
    lengths = jnp.sum(jnp.asarray(mask_bs) > 0, axis=1).astype(jnp.int32)
    bptrs, scores, best_tag = crf_viterbi_pallas(feats_bst, lengths, transitions,
                                                 start_idx=start_idx)
    path_tags, pre_tag = viterbi_backtrace_device(bptrs, lengths, best_tag)

    # TODO(synk): variable-length Python-list construction has no Pallas
    # equivalent; host-side glue over the (B, S) device-computed paths.
    scores_np = np.asarray(jax.device_get(scores))
    path_np = np.asarray(jax.device_get(path_tags))
    pre_np = np.asarray(jax.device_get(pre_tag))
    len_np = np.asarray(jax.device_get(lengths))

    best_paths = []
    for b in range(feats_bst.shape[0]):
        L = int(len_np[b])
        path = [int(pre_np[b])] + [int(x) for x in path_np[b, :L]]
        if path and path[0] == start_idx:
            path = path[1:]
        best_paths.append(path)
    return scores_np, best_paths


# ---------------------------------------------------------------------------
# Pure-numpy reference (direct transcription of the PyTorch _viterbi_decode)
# ---------------------------------------------------------------------------
def viterbi_reference_decode(feats, mask, trans, start_idx, end_idx):
    B, S, T = feats.shape
    vvars = np.full((B, T), NEG_INF, dtype=np.float32)
    vvars[:, start_idx] = 0.0
    backpointers = []
    for i in range(S):
        ntv = vvars[:, :, None] + trans[None, :, :]          # (B, Tp, Tn)
        best_prev = ntv.argmax(axis=1)                       # first occurrence
        best_val = np.take_along_axis(ntv, best_prev[:, None, :], axis=1)[:, 0, :]
        backpointers.append(best_prev)
        vnew = (best_val + feats[:, i]).astype(np.float32)
        m = mask[:, i][:, None].astype(np.float32)
        vvars = (m * vnew + (1.0 - m) * vvars).astype(np.float32)
    term = (vvars + trans[:, end_idx][None, :]).astype(np.float32)
    best_tag = term.argmax(axis=1)
    best_scores = np.take_along_axis(term, best_tag[:, None], axis=1)[:, 0]
    paths = []
    for b in range(B):
        path = [int(best_tag[b])]
        seq_len_b = int(mask[b].sum())
        for t in reversed(range(seq_len_b)):
            path.append(int(backpointers[t][b, path[-1]]))
        path.reverse()
        if path and path[0] == start_idx:
            path = path[1:]
        paths.append(path)
    return best_scores, paths


if __name__ == "__main__":
    B, S, T = 2, 8, 64            # batch=2, seq=8, target_size=64 (len(TAG_LIST))
    START_TAG_IDX, END_TAG_IDX = 1, T - 1

    key = jax.random.PRNGKey(0)
    k_feats, k_trans = jax.random.split(key)

    feats = jax.random.normal(k_feats, (B, S, T), dtype=jnp.float32)
    lengths = np.array([S, 5])
    mask_np = (np.arange(S)[None, :] < lengths[:, None]).astype(np.float32)
    mask = jnp.asarray(mask_np)
    transitions = build_transitions(T, k_trans)

    scores, best_paths = crf_forward(feats, mask, transitions,
                                     start_idx=START_TAG_IDX)
    jax.block_until_ready(jnp.asarray(scores))

    ref_scores, ref_paths = viterbi_reference_decode(
        np.asarray(feats), mask_np, np.asarray(transitions),
        START_TAG_IDX, END_TAG_IDX)

    assert np.allclose(scores, ref_scores, rtol=1e-5, atol=1e-4), \
        f"scores mismatch: {scores} vs {ref_scores}"
    assert best_paths == ref_paths, \
        f"paths mismatch: {best_paths} vs {ref_paths}"

    print("KERNEL_OK")
</pallas_src>

<mosaic_0001>
module attributes {stable_mosaic.version = 11 : i64} {
  func.func @viterbi_kernel(%arg0: i32, %arg1: i32, %arg2: memref<2xi32, #tpu.memory_space<smem>>, %arg3: memref<1x8x128xf32, #tpu.memory_space<vmem>>, %arg4: memref<64x128xf32, #tpu.memory_space<vmem>>, %arg5: memref<1x128xf32, #tpu.memory_space<vmem>>, %arg6: memref<1x8x128xi32, #tpu.memory_space<vmem>>, %arg7: memref<1x1x1xf32, #tpu.memory_space<vmem>>, %arg8: memref<1x1x1xi32, #tpu.memory_space<vmem>>, %arg9: memref<1x128xf32, #tpu.memory_space<vmem>>) attributes {dimension_semantics = [#tpu.dimension_semantics<parallel>, #tpu.dimension_semantics<arbitrary>], iteration_bounds = array<i64: 2, 1>, scalar_prefetch = 1 : i64, scratch_operands = 1 : i64, tpu.core_type = #tpu.core_type<tc>, window_params = [{transform_indices = @transform_0, window_bounds = array<i64: 1, 8, 128>}, {pipeline_mode = #tpu.pipeline_mode<synchronous>, transform_indices = @transform_1, window_bounds = array<i64: 64, 128>}, {pipeline_mode = #tpu.pipeline_mode<synchronous>, transform_indices = @transform_2, window_bounds = array<i64: 1, 128>}, {transform_indices = @transform_3, window_bounds = array<i64: 1, 8, 128>}, {transform_indices = @transform_4, window_bounds = array<i64: 1, 1, 1>}, {transform_indices = @transform_5, window_bounds = array<i64: 1, 1, 1>}]} {
    %0 = arith.index_cast %arg0 : i32 to index
    %1 = memref.load %arg2[%0] : memref<2xi32, #tpu.memory_space<smem>>
    %c0_i32 = arith.constant 0 : i32
    %2 = arith.cmpi eq, %arg1, %c0_i32 : i32
    %3 = arith.extui %2 : i1 to i32
    %c0_i32_0 = arith.constant 0 : i32
    %4 = arith.cmpi ne, %3, %c0_i32_0 : i32
    scf.if %4 {
      %173 = tpu.iota {dimensions = array<i32: 1>} : vector<1x128xi32>
      %c1_i32_38 = arith.constant 1 : i32
      %174 = vector.broadcast %c1_i32_38 : i32 to vector<1x128xi32>
      %175 = arith.cmpi eq, %173, %174 : vector<1x128xi32>
      %cst_39 = arith.constant 0.000000e+00 : f32
      %cst_40 = arith.constant -1.000000e+04 : f32
      %176 = vector.broadcast %cst_39 : f32 to vector<1x128xf32>
      %177 = vector.broadcast %cst_40 : f32 to vector<1x128xf32>
      %178 = arith.select %175, %176, %177 : vector<1x128xi1>, vector<1x128xf32>
      %c0_41 = arith.constant 0 : index
      %c0_42 = arith.constant 0 : index
      %179 = vector.load %arg9[%c0_41, %c0_42] : memref<1x128xf32, #tpu.memory_space<vmem>>, vector<1x128xf32>
      tpu.vector_store %arg9[%c0_41, %c0_42], %178 {strides = array<i32>} : memref<1x128xf32, #tpu.memory_space<vmem>>, vector<1x128xf32>,
    } else {
    }
    %c0 = arith.constant 0 : index
    %c0_1 = arith.constant 0 : index
    %5 = vector.load %arg4[%c0, %c0_1] : memref<64x128xf32, #tpu.memory_space<vmem>>, vector<64x128xf32>
    %6 = vector.shape_cast %5 : vector<64x128xf32> to vector<1x64x128xf32>
    %7 = tpu.iota {dimensions = array<i32: 1>} : vector<1x64x128xi32>
    %c8_i32 = arith.constant 8 : i32
    %8 = arith.muli %arg1, %c8_i32 : i32
    %c0_2 = arith.constant 0 : index
    %c0_3 = arith.constant 0 : index
    %9 = vector.load %arg9[%c0_2, %c0_3] : memref<1x128xf32, #tpu.memory_space<vmem>>, vector<1x128xf32>
    %c0_i32_4 = arith.constant 0 : i32
    %c8_i32_5 = arith.constant 8 : i32
    %10 = arith.muli %c0_i32_4, %c8_i32_5 : i32
    %11 = tpu.assume_multiple %10, 8 : i32
    %c0_6 = arith.constant 0 : index
    %12 = arith.index_cast %11 : i32 to index
    %c0_7 = arith.constant 0 : index
    %13 = vector.load %arg3[%c0_6, %12, %c0_7] : memref<1x8x128xf32, #tpu.memory_space<vmem>>, vector<1x8x128xf32>
    %14 = vector.extract_strided_slice %9 {offsets = [0, 0], sizes = [1, 64], strides = [1, 1]} : vector<1x128xf32> to vector<1x64xf32>
    %15 = vector.shape_cast %14 : vector<1x64xf32> to vector<1x64x1xf32>
    %16 = vector.broadcast %15 : vector<1x64x1xf32> to vector<1x64x128xf32>
    %17 = arith.addf %16, %6 : vector<1x64x128xf32>
    %cst = arith.constant dense<0xFF800000> : vector<1x128xf32>
    %18 = vector.multi_reduction <maximumf>, %17, %cst [1] : vector<1x64x128xf32> to vector<1x128xf32>
    %19 = vector.shape_cast %18 : vector<1x128xf32> to vector<1x1x128xf32>
    %20 = vector.broadcast %19 : vector<1x1x128xf32> to vector<1x64x128xf32>
    %21 = arith.cmpf oeq, %17, %20 : vector<1x64x128xf32>
    %c64_i32 = arith.constant 64 : i32
    %22 = vector.broadcast %c64_i32 : i32 to vector<1x64x128xi32>
    %23 = arith.select %21, %7, %22 : vector<1x64x128xi1>, vector<1x64x128xi32>
    %cst_8 = arith.constant dense<2147483647> : vector<1x128xi32>
    %24 = vector.multi_reduction <minsi>, %23, %cst_8 [1] : vector<1x64x128xi32> to vector<1x128xi32>
    %25 = vector.extract_strided_slice %13 {offsets = [0, 0, 0], sizes = [1, 1, 128], strides = [1, 1, 1]} : vector<1x8x128xf32> to vector<1x1x128xf32>
    %26 = vector.shape_cast %25 : vector<1x1x128xf32> to vector<1x128xf32>
    %27 = arith.addf %18, %26 : vector<1x128xf32>
    %28 = arith.addi %8, %11 : i32
    %c0_i32_9 = arith.constant 0 : i32
    %29 = arith.addi %28, %c0_i32_9 : i32
    %30 = arith.cmpi slt, %29, %1 : i32
    %31 = arith.select %30, %27, %9 : vector<1x128xf32>
    %32 = vector.extract_strided_slice %31 {offsets = [0, 0], sizes = [1, 64], strides = [1, 1]} : vector<1x128xf32> to vector<1x64xf32>
    %33 = vector.shape_cast %32 : vector<1x64xf32> to vector<1x64x1xf32>
    %34 = vector.broadcast %33 : vector<1x64x1xf32> to vector<1x64x128xf32>
    %35 = arith.addf %34, %6 : vector<1x64x128xf32>
    %cst_10 = arith.constant dense<0xFF800000> : vector<1x128xf32>
    %36 = vector.multi_reduction <maximumf>, %35, %cst_10 [1] : vector<1x64x128xf32> to vector<1x128xf32>
    %37 = vector.shape_cast %36 : vector<1x128xf32> to vector<1x1x128xf32>
    %38 = vector.broadcast %37 : vector<1x1x128xf32> to vector<1x64x128xf32>
    %39 = arith.cmpf oeq, %35, %38 : vector<1x64x128xf32>
    %c64_i32_11 = arith.constant 64 : i32
    %40 = vector.broadcast %c64_i32_11 : i32 to vector<1x64x128xi32>
    %41 = arith.select %39, %7, %40 : vector<1x64x128xi1>, vector<1x64x128xi32>
    %cst_12 = arith.constant dense<2147483647> : vector<1x128xi32>
    %42 = vector.multi_reduction <minsi>, %41, %cst_12 [1] : vector<1x64x128xi32> to vector<1x128xi32>
    %43 = vector.extract_strided_slice %13 {offsets = [0, 1, 0], sizes = [1, 1, 128], strides = [1, 1, 1]} : vector<1x8x128xf32> to vector<1x1x128xf32>
    %44 = vector.shape_cast %43 : vector<1x1x128xf32> to vector<1x128xf32>
    %45 = arith.addf %36, %44 : vector<1x128xf32>
    %46 = arith.addi %8, %11 : i32
    %c1_i32 = arith.constant 1 : i32
    %47 = arith.addi %46, %c1_i32 : i32
    %48 = arith.cmpi slt, %47, %1 : i32
    %49 = arith.select %48, %45, %31 : vector<1x128xf32>
    %50 = vector.extract_strided_slice %49 {offsets = [0, 0], sizes = [1, 64], strides = [1, 1]} : vector<1x128xf32> to vector<1x64xf32>
    %51 = vector.shape_cast %50 : vector<1x64xf32> to vector<1x64x1xf32>
    %52 = vector.broadcast %51 : vector<1x64x1xf32> to vector<1x64x128xf32>
    %53 = arith.addf %52, %6 : vector<1x64x128xf32>
    %cst_13 = arith.constant dense<0xFF800000> : vector<1x128xf32>
    %54 = vector.multi_reduction <maximumf>, %53, %cst_13 [1] : vector<1x64x128xf32> to vector<1x128xf32>
    %55 = vector.shape_cast %54 : vector<1x128xf32> to vector<1x1x128xf32>
    %56 = vector.broadcast %55 : vector<1x1x128xf32> to vector<1x64x128xf32>
    %57 = arith.cmpf oeq, %53, %56 : vector<1x64x128xf32>
    %c64_i32_14 = arith.constant 64 : i32
    %58 = vector.broadcast %c64_i32_14 : i32 to vector<1x64x128xi32>
    %59 = arith.select %57, %7, %58 : vector<1x64x128xi1>, vector<1x64x128xi32>
    %cst_15 = arith.constant dense<2147483647> : vector<1x128xi32>
    %60 = vector.multi_reduction <minsi>, %59, %cst_15 [1] : vector<1x64x128xi32> to vector<1x128xi32>
    %61 = vector.extract_strided_slice %13 {offsets = [0, 2, 0], sizes = [1, 1, 128], strides = [1, 1, 1]} : vector<1x8x128xf32> to vector<1x1x128xf32>
    %62 = vector.shape_cast %61 : vector<1x1x128xf32> to vector<1x128xf32>
    %63 = arith.addf %54, %62 : vector<1x128xf32>
    %64 = arith.addi %8, %11 : i32
    %c2_i32 = arith.constant 2 : i32
    %65 = arith.addi %64, %c2_i32 : i32
    %66 = arith.cmpi slt, %65, %1 : i32
    %67 = arith.select %66, %63, %49 : vector<1x128xf32>
    %68 = vector.extract_strided_slice %67 {offsets = [0, 0], sizes = [1, 64], strides = [1, 1]} : vector<1x128xf32> to vector<1x64xf32>
    %69 = vector.shape_cast %68 : vector<1x64xf32> to vector<1x64x1xf32>
    %70 = vector.broadcast %69 : vector<1x64x1xf32> to vector<1x64x128xf32>
    %71 = arith.addf %70, %6 : vector<1x64x128xf32>
    %cst_16 = arith.constant dense<0xFF800000> : vector<1x128xf32>
    %72 = vector.multi_reduction <maximumf>, %71, %cst_16 [1] : vector<1x64x128xf32> to vector<1x128xf32>
    %73 = vector.shape_cast %72 : vector<1x128xf32> to vector<1x1x128xf32>
    %74 = vector.broadcast %73 : vector<1x1x128xf32> to vector<1x64x128xf32>
    %75 = arith.cmpf oeq, %71, %74 : vector<1x64x128xf32>
    %c64_i32_17 = arith.constant 64 : i32
    %76 = vector.broadcast %c64_i32_17 : i32 to vector<1x64x128xi32>
    %77 = arith.select %75, %7, %76 : vector<1x64x128xi1>, vector<1x64x128xi32>
    %cst_18 = arith.constant dense<2147483647> : vector<1x128xi32>
    %78 = vector.multi_reduction <minsi>, %77, %cst_18 [1] : vector<1x64x128xi32> to vector<1x128xi32>
    %79 = vector.extract_strided_slice %13 {offsets = [0, 3, 0], sizes = [1, 1, 128], strides = [1, 1, 1]} : vector<1x8x128xf32> to vector<1x1x128xf32>
    %80 = vector.shape_cast %79 : vector<1x1x128xf32> to vector<1x128xf32>
    %81 = arith.addf %72, %80 : vector<1x128xf32>
    %82 = arith.addi %8, %11 : i32
    %c3_i32 = arith.constant 3 : i32
    %83 = arith.addi %82, %c3_i32 : i32
    %84 = arith.cmpi slt, %83, %1 : i32
    %85 = arith.select %84, %81, %67 : vector<1x128xf32>
    %86 = vector.extract_strided_slice %85 {offsets = [0, 0], sizes = [1, 64], strides = [1, 1]} : vector<1x128xf32> to vector<1x64xf32>
    %87 = vector.shape_cast %86 : vector<1x64xf32> to vector<1x64x1xf32>
    %88 = vector.broadcast %87 : vector<1x64x1xf32> to vector<1x64x128xf32>
    %89 = arith.addf %88, %6 : vector<1x64x128xf32>
    %cst_19 = arith.constant dense<0xFF800000> : vector<1x128xf32>
    %90 = vector.multi_reduction <maximumf>, %89, %cst_19 [1] : vector<1x64x128xf32> to vector<1x128xf32>
    %91 = vector.shape_cast %90 : vector<1x128xf32> to vector<1x1x128xf32>
    %92 = vector.broadcast %91 : vector<1x1x128xf32> to vector<1x64x128xf32>
    %93 = arith.cmpf oeq, %89, %92 : vector<1x64x128xf32>
    %c64_i32_20 = arith.constant 64 : i32
    %94 = vector.broadcast %c64_i32_20 : i32 to vector<1x64x128xi32>
    %95 = arith.select %93, %7, %94 : vector<1x64x128xi1>, vector<1x64x128xi32>
    %cst_21 = arith.constant dense<2147483647> : vector<1x128xi32>
    %96 = vector.multi_reduction <minsi>, %95, %cst_21 [1] : vector<1x64x128xi32> to vector<1x128xi32>
    %97 = vector.extract_strided_slice %13 {offsets = [0, 4, 0], sizes = [1, 1, 128], strides = [1, 1, 1]} : vector<1x8x128xf32> to vector<1x1x128xf32>
    %98 = vector.shape_cast %97 : vector<1x1x128xf32> to vector<1x128xf32>
    %99 = arith.addf %90, %98 : vector<1x128xf32>
    %100 = arith.addi %8, %11 : i32
    %c4_i32 = arith.constant 4 : i32
    %101 = arith.addi %100, %c4_i32 : i32
    %102 = arith.cmpi slt, %101, %1 : i32
    %103 = arith.select %102, %99, %85 : vector<1x128xf32>
    %104 = vector.extract_strided_slice %103 {offsets = [0, 0], sizes = [1, 64], strides = [1, 1]} : vector<1x128xf32> to vector<1x64xf32>
    %105 = vector.shape_cast %104 : vector<1x64xf32> to vector<1x64x1xf32>
    %106 = vector.broadcast %105 : vector<1x64x1xf32> to vector<1x64x128xf32>
    %107 = arith.addf %106, %6 : vector<1x64x128xf32>
    %cst_22 = arith.constant dense<0xFF800000> : vector<1x128xf32>
    %108 = vector.multi_reduction <maximumf>, %107, %cst_22 [1] : vector<1x64x128xf32> to vector<1x128xf32>
    %109 = vector.shape_cast %108 : vector<1x128xf32> to vector<1x1x128xf32>
    %110 = vector.broadcast %109 : vector<1x1x128xf32> to vector<1x64x128xf32>
    %111 = arith.cmpf oeq, %107, %110 : vector<1x64x128xf32>
    %c64_i32_23 = arith.constant 64 : i32
    %112 = vector.broadcast %c64_i32_23 : i32 to vector<1x64x128xi32>
    %113 = arith.select %111, %7, %112 : vector<1x64x128xi1>, vector<1x64x128xi32>
    %cst_24 = arith.constant dense<2147483647> : vector<1x128xi32>
    %114 = vector.multi_reduction <minsi>, %113, %cst_24 [1] : vector<1x64x128xi32> to vector<1x128xi32>
    %115 = vector.extract_strided_slice %13 {offsets = [0, 5, 0], sizes = [1, 1, 128], strides = [1, 1, 1]} : vector<1x8x128xf32> to vector<1x1x128xf32>
    %116 = vector.shape_cast %115 : vector<1x1x128xf32> to vector<1x128xf32>
    %117 = arith.addf %108, %116 : vector<1x128xf32>
    %118 = arith.addi %8, %11 : i32
    %c5_i32 = arith.constant 5 : i32
    %119 = arith.addi %118, %c5_i32 : i32
    %120 = arith.cmpi slt, %119, %1 : i32
    %121 = arith.select %120, %117, %103 : vector<1x128xf32>
    %122 = vector.extract_strided_slice %121 {offsets = [0, 0], sizes = [1, 64], strides = [1, 1]} : vector<1x128xf32> to vector<1x64xf32>
    %123 = vector.shape_cast %122 : vector<1x64xf32> to vector<1x64x1xf32>
    %124 = vector.broadcast %123 : vector<1x64x1xf32> to vector<1x64x128xf32>
    %125 = arith.addf %124, %6 : vector<1x64x128xf32>
    %cst_25 = arith.constant dense<0xFF800000> : vector<1x128xf32>
    %126 = vector.multi_reduction <maximumf>, %125, %cst_25 [1] : vector<1x64x128xf32> to vector<1x128xf32>
    %127 = vector.shape_cast %126 : vector<1x128xf32> to vector<1x1x128xf32>
    %128 = vector.broadcast %127 : vector<1x1x128xf32> to vector<1x64x128xf32>
    %129 = arith.cmpf oeq, %125, %128 : vector<1x64x128xf32>
    %c64_i32_26 = arith.constant 64 : i32
    %130 = vector.broadcast %c64_i32_26 : i32 to vector<1x64x128xi32>
    %131 = arith.select %129, %7, %130 : vector<1x64x128xi1>, vector<1x64x128xi32>
    %cst_27 = arith.constant dense<2147483647> : vector<1x128xi32>
    %132 = vector.multi_reduction <minsi>, %131, %cst_27 [1] : vector<1x64x128xi32> to vector<1x128xi32>
    %133 = vector.extract_strided_slice %13 {offsets = [0, 6, 0], sizes = [1, 1, 128], strides = [1, 1, 1]} : vector<1x8x128xf32> to vector<1x1x128xf32>
    %134 = vector.shape_cast %133 : vector<1x1x128xf32> to vector<1x128xf32>
    %135 = arith.addf %126, %134 : vector<1x128xf32>
    %136 = arith.addi %8, %11 : i32
    %c6_i32 = arith.constant 6 : i32
    %137 = arith.addi %136, %c6_i32 : i32
    %138 = arith.cmpi slt, %137, %1 : i32
    %139 = arith.select %138, %135, %121 : vector<1x128xf32>
    %140 = vector.extract_strided_slice %139 {offsets = [0, 0], sizes = [1, 64], strides = [1, 1]} : vector<1x128xf32> to vector<1x64xf32>
    %141 = vector.shape_cast %140 : vector<1x64xf32> to vector<1x64x1xf32>
    %142 = vector.broadcast %141 : vector<1x64x1xf32> to vector<1x64x128xf32>
    %143 = arith.addf %142, %6 : vector<1x64x128xf32>
    %cst_28 = arith.constant dense<0xFF800000> : vector<1x128xf32>
    %144 = vector.multi_reduction <maximumf>, %143, %cst_28 [1] : vector<1x64x128xf32> to vector<1x128xf32>
    %145 = vector.shape_cast %144 : vector<1x128xf32> to vector<1x1x128xf32>
    %146 = vector.broadcast %145 : vector<1x1x128xf32> to vector<1x64x128xf32>
    %147 = arith.cmpf oeq, %143, %146 : vector<1x64x128xf32>
    %c64_i32_29 = arith.constant 64 : i32
    %148 = vector.broadcast %c64_i32_29 : i32 to vector<1x64x128xi32>
    %149 = arith.select %147, %7, %148 : vector<1x64x128xi1>, vector<1x64x128xi32>
    %cst_30 = arith.constant dense<2147483647> : vector<1x128xi32>
    %150 = vector.multi_reduction <minsi>, %149, %cst_30 [1] : vector<1x64x128xi32> to vector<1x128xi32>
    %151 = vector.extract_strided_slice %13 {offsets = [0, 7, 0], sizes = [1, 1, 128], strides = [1, 1, 1]} : vector<1x8x128xf32> to vector<1x1x128xf32>
    %152 = vector.shape_cast %151 : vector<1x1x128xf32> to vector<1x128xf32>
    %153 = arith.addf %144, %152 : vector<1x128xf32>
    %154 = arith.addi %8, %11 : i32
    %c7_i32 = arith.constant 7 : i32
    %155 = arith.addi %154, %c7_i32 : i32
    %156 = arith.cmpi slt, %155, %1 : i32
    %157 = arith.select %156, %153, %139 : vector<1x128xf32>
    %158 = vector.shape_cast %24 : vector<1x128xi32> to vector<1x1x128xi32>
    %159 = vector.shape_cast %42 : vector<1x128xi32> to vector<1x1x128xi32>
    %160 = vector.shape_cast %60 : vector<1x128xi32> to vector<1x1x128xi32>
    %161 = vector.shape_cast %78 : vector<1x128xi32> to vector<1x1x128xi32>
    %162 = vector.shape_cast %96 : vector<1x128xi32> to vector<1x1x128xi32>
    %163 = vector.shape_cast %114 : vector<1x128xi32> to vector<1x1x128xi32>
    %164 = vector.shape_cast %132 : vector<1x128xi32> to vector<1x1x128xi32>
    %165 = vector.shape_cast %150 : vector<1x128xi32> to vector<1x1x128xi32>
    %166 = tpu.concatenate %158, %159, %160, %161, %162, %163, %164, %165 in 1 : vector<1x1x128xi32>, vector<1x1x128xi32>, vector<1x1x128xi32>, vector<1x1x128xi32>, vector<1x1x128xi32>, vector<1x1x128xi32>, vector<1x1x128xi32>, vector<1x1x128xi32> -> vector<1x8x128xi32>
    %c0_31 = arith.constant 0 : index
    %167 = arith.index_cast %11 : i32 to index
    %c0_32 = arith.constant 0 : index
    %168 = vector.load %arg6[%c0_31, %167, %c0_32] : memref<1x8x128xi32, #tpu.memory_space<vmem>>, vector<1x8x128xi32>
    tpu.vector_store %arg6[%c0_31, %167, %c0_32], %166 {strides = array<i32>} : memref<1x8x128xi32, #tpu.memory_space<vmem>>, vector<1x8x128xi32>,
    %c1_i32_33 = arith.constant 1 : i32
    %c0_34 = arith.constant 0 : index
    %c0_35 = arith.constant 0 : index
    %169 = vector.load %arg9[%c0_34, %c0_35] : memref<1x128xf32, #tpu.memory_space<vmem>>, vector<1x128xf32>
    tpu.vector_store %arg9[%c0_34, %c0_35], %157 {strides = array<i32>} : memref<1x128xf32, #tpu.memory_space<vmem>>, vector<1x128xf32>,
    %c0_i32_36 = arith.constant 0 : i32
    %170 = arith.cmpi eq, %arg1, %c0_i32_36 : i32
    %171 = arith.extui %170 : i1 to i32
    %c0_i32_37 = arith.constant 0 : i32
    %172 = arith.cmpi ne, %171, %c0_i32_37 : i32
    scf.if %172 {
      %c0_38 = arith.constant 0 : index
      %c0_39 = arith.constant 0 : index
      %173 = vector.load %arg5[%c0_38, %c0_39] : memref<1x128xf32, #tpu.memory_space<vmem>>, vector<1x128xf32>
      %174 = arith.addf %157, %173 : vector<1x128xf32>
      %cst_40 = arith.constant dense<0xFF800000> : vector<1xf32>
      %175 = vector.multi_reduction <maximumf>, %174, %cst_40 [1] : vector<1x128xf32> to vector<1xf32>
      %176 = vector.shape_cast %175 : vector<1xf32> to vector<1x1xf32>
      %177 = tpu.iota {dimensions = array<i32: 1>} : vector<1x128xi32>
      %178 = vector.broadcast %176 : vector<1x1xf32> to vector<1x128xf32>
      %179 = arith.cmpf oeq, %174, %178 : vector<1x128xf32>
      %c128_i32 = arith.constant 128 : i32
      %180 = vector.broadcast %c128_i32 : i32 to vector<1x128xi32>
      %181 = arith.select %179, %177, %180 : vector<1x128xi1>, vector<1x128xi32>
      %cst_41 = arith.constant dense<2147483647> : vector<1xi32>
      %182 = vector.multi_reduction <minsi>, %181, %cst_41 [1] : vector<1x128xi32> to vector<1xi32>
      %183 = vector.shape_cast %182 : vector<1xi32> to vector<1x1xi32>
      %184 = vector.shape_cast %176 : vector<1x1xf32> to vector<1x1x1xf32>
      %c0_42 = arith.constant 0 : index
      %c0_43 = arith.constant 0 : index
      %c0_44 = arith.constant 0 : index
      %185 = vector.load %arg7[%c0_42, %c0_43, %c0_44] : memref<1x1x1xf32, #tpu.memory_space<vmem>>, vector<1x1x1xf32>
      tpu.vector_store %arg7[%c0_42, %c0_43, %c0_44], %184 {strides = array<i32>} : memref<1x1x1xf32, #tpu.memory_space<vmem>>, vector<1x1x1xf32>,
      %186 = vector.shape_cast %183 : vector<1x1xi32> to vector<1x1x1xi32>
      %c0_45 = arith.constant 0 : index
      %c0_46 = arith.constant 0 : index
      %c0_47 = arith.constant 0 : index
      %187 = vector.load %arg8[%c0_45, %c0_46, %c0_47] : memref<1x1x1xi32, #tpu.memory_space<vmem>>, vector<1x1x1xi32>
      tpu.vector_store %arg8[%c0_45, %c0_46, %c0_47], %186 {strides = array<i32>} : memref<1x1x1xi32, #tpu.memory_space<vmem>>, vector<1x1x1xi32>,
    } else {
    }
    return
  }
  func.func @transform_0(%arg0: i32, %arg1: i32, %arg2: memref<2xi32, #tpu.memory_space<smem>>) -> (i32, i32, i32) {
    %c0_i32 = arith.constant 0 : i32
    %c0_i32_0 = arith.constant 0 : i32
    return %arg0, %arg1, %c0_i32 : i32, i32, i32
  }
  func.func @transform_1(%arg0: i32, %arg1: i32, %arg2: memref<2xi32, #tpu.memory_space<smem>>) -> (i32, i32) {
    %c0_i32 = arith.constant 0 : i32
    %c0_i32_0 = arith.constant 0 : i32
    %c0_i32_1 = arith.constant 0 : i32
    return %c0_i32, %c0_i32_0 : i32, i32
  }
  func.func @transform_2(%arg0: i32, %arg1: i32, %arg2: memref<2xi32, #tpu.memory_space<smem>>) -> (i32, i32) {
    %c0_i32 = arith.constant 0 : i32
    %c0_i32_0 = arith.constant 0 : i32
    %c0_i32_1 = arith.constant 0 : i32
    return %c0_i32, %c0_i32_0 : i32, i32
  }
  func.func @transform_3(%arg0: i32, %arg1: i32, %arg2: memref<2xi32, #tpu.memory_space<smem>>) -> (i32, i32, i32) {
    %c0_i32 = arith.constant 0 : i32
    %c0_i32_0 = arith.constant 0 : i32
    return %arg0, %arg1, %c0_i32 : i32, i32, i32
  }
  func.func @transform_4(%arg0: i32, %arg1: i32, %arg2: memref<2xi32, #tpu.memory_space<smem>>) -> (i32, i32, i32) {
    %c0_i32 = arith.constant 0 : i32
    %c0_i32_0 = arith.constant 0 : i32
    %c0_i32_1 = arith.constant 0 : i32
    return %arg0, %c0_i32, %c0_i32_0 : i32, i32, i32
  }
  func.func @transform_5(%arg0: i32, %arg1: i32, %arg2: memref<2xi32, #tpu.memory_space<smem>>) -> (i32, i32, i32) {
    %c0_i32 = arith.constant 0 : i32
    %c0_i32_0 = arith.constant 0 : i32
    %c0_i32_1 = arith.constant 0 : i32
    return %arg0, %c0_i32, %c0_i32_0 : i32, i32, i32
  }
}

</mosaic_0001>

<llo_original>
// kernel: tpu_custom_call.1
$region0: #{tpu_custom_call.1}
  #allocation0 [shape = 'u32[]', space=smem, size = 0x4, offset = 0x4, fixed_abs, tag = 'smem constant byte address 0x4 - core index']
  #allocation1 [shape = 'u32[144,128]{1,0:T(1,128)}', space=vmem, size = 0x12000, scoped, tag = 'internal scratch']
  #allocation2 [shape = 'f32[1,128]{1,0:T(1,128)}', space=vmem, size = 0x200, scoped, tag = 'scratch operand']
  #allocation3 [shape = 's32[1]{0}', space=sflag, size = 0x4, scoped, tag = 'scoped memory for tpu_custom_call.1']
  #allocation4 [shape = 'u8[512]{0}', space=smem, size = 0x200, scoped, tag = 'prefetched SMEM operand 0']
  %s0 = inlined_call_operand.hbm [shape: s32[2], index: 0, kind: input, shape index: {}]
  %s1 = inlined_call_operand.hbm [shape: f32[2,8,128], index: 1, kind: input, shape index: {}]
  %s2 = inlined_call_operand.hbm [shape: f32[64,128], index: 2, kind: input, shape index: {}]
  %s3 = inlined_call_operand.vmem [shape: f32[1,128], index: 3, kind: input, shape index: {}]
  %s4 = inlined_call_operand.hbm [shape: s32[2,8,128], index: 4, kind: output, shape index: {0}]
  %s5 = inlined_call_operand.vmem [shape: f32[2,1,1], index: 5, kind: output, shape index: {1}]
  %s6 = inlined_call_operand.vmem [shape: s32[2,1,1], index: 6, kind: output, shape index: {2}]
  %7 = xla_tuple %s4, %s5, %s6
  %s8 = sld [smem:[#allocation0]]
  $region77: #{tpu_custom_call.1} parent=0
    _
  %s10 = ssub.s32 1, %s8
  %s11 = scalar_select 0, %s10, %s8
  %13 = dma.hbm_to_smem %s0, 16, [#allocation4], [#allocation3]
  %14 = dma.done [#allocation3], 16
  %15 = sfence
  $region1: #{tpu_custom_call.1} parent=0
    #allocation5 [shape = 'u8[8192]{0}', space=vmem, size = 0x2000, scoped, tag = 'input window, operand 1']
    #allocation6 [shape = 's32[2]{0}', space=sflag, size = 0x8, scoped, tag = 'scoped memory for tpu_custom_call.1']
    #allocation7 [shape = 's32[2]{0}', space=sflag, size = 0x8, scoped, tag = 'scoped memory for tpu_custom_call.1']
    #allocation8 [shape = 'u8[32768]{0}', space=vmem, size = 0x8000, scoped, tag = 'input window, operand 2, single buffered']
    #allocation9 [shape = 's32[1]{0}', space=sflag, size = 0x4, scoped, tag = 'scoped memory for tpu_custom_call.1']
    #allocation10 [shape = 'u8[8192]{0}', space=vmem, size = 0x2000, scoped, tag = 'output window, operand 0']
    %16 = vsyncpa [#allocation6], 0
    %s17 = scalar_lea.sflag [#allocation6], 1
    %18 = vsyncpa %s17, 0
    %19 = vsyncpa [#allocation9], 0
    %20 = vsyncpa [#allocation7], 0
    %s21 = scalar_lea.sflag [#allocation7], 1
    %22 = vsyncpa %s21, 0
    loop: start=0, step=1, limit=4
    $region2: #{tpu_custom_call.1} parent=1 // loop_pre_header
      _
    $region3: #{tpu_custom_call.1} parent=1 // loop_header
      %s24 = sphi 0, %s28
      %p25 = scmp.ge.s32.totalorder %s24, 4
      %s31 = sphi 0, %s43
      %s32 = sphi 0, %s39
      %s33 = sphi 0, %s31
      %s34 = sphi 0, %s32
      %s35 = sphi 0, %s33
      %s36 = sphi 0, %s34
      %s48 = sphi 0, %s50
      %s51 = sphi 0, %s48
      %s52 = sphi 0, %s51
      %s68 = sphi 0, %s52
      %s72 = sphi 0, %s72
      %s74 = sphi 0, %s72
      %s75 = sphi 0, %s74
      %s89 = sphi 0, %s75
      %s93 = sphi 0, %s93
      %s95 = sphi 0, %s93
      %s96 = sphi 0, %s95
      %s110 = sphi 0, %s96
      %s118 = sphi 0, %s120
      %s121 = sphi 0, %s118
      %s122 = sphi 0, %s121
      %s138 = sphi 0, %s122
      %s144 = sphi 0, %s146
      %s147 = sphi 0, %s144
      %s148 = sphi 0, %s147
      %s164 = sphi 0, %s148
      %s170 = sphi 0, %s172
      %s173 = sphi 0, %s170
      %s174 = sphi 0, %s173
      %s190 = sphi 0, %s174
    $region4: #{tpu_custom_call.1} parent=1 // loop_header_branch
      %27 = sbr.rel (%p25) target = $region8
    $region5: #{tpu_custom_call.1} parent=1 // loop_body
      %s29 = ssub.s32 %s24, 1
      %s30 = ssub.s32 %s24, 2
      %s37 = sadd.s32 1, %s32
      %p38 = scmp.ge.s32.totalorder %s37, 1
      %s39 = scalar_select %p38, 0, %s37
      %s40 = sadd.s32 1, %s31
      %s41 = scalar_select %p38, %s40, %s31
      %p42 = scmp.ge.s32.totalorder %s41, 2
      %s43 = scalar_select %p42, 0, %s41
      %s44 = ssub.s32 %s31, %s43
      %s45 = ssub.s32 %s32, %s39
      %s46 = sor.u32 %s44, %s45
      %p47 = scmp.eq.s32.totalorder %s46, 0
      %s49 = sadd.s32 %s48, 1
      %s50 = scalar_select %p47, %s48, %s49
      %p53 = pneg %p47
      %p54 = scmp.eq.s32.totalorder %s24, 1
      %p55 = por %p53, %p54
      %p56 = scmp.ne.s32.totalorder %s48, %s51
      %p57 = scmp.eq.s32.totalorder %s24, 0
      %p58 = por %p56, %p57
      %p59 = scmp.ne.s32.totalorder %s48, %s51
      %p60 = scmp.eq.s32.totalorder %s29, 1
      %p61 = por %p59, %p60
      %p62 = scmp.ne.s32.totalorder %s51, %s52
      %p63 = scmp.eq.s32.totalorder %s29, 0
      %p64 = por %p62, %p63
      %p65 = scmp.ne.s32.totalorder %s51, %s52
      %p66 = scmp.eq.s32.totalorder %s30, 1
      %p67 = por %p65, %p66
      %p69 = scmp.ne.s32.totalorder %s52, %s68
      %p70 = scmp.eq.s32.totalorder %s30, 0
      %p71 = por %p69, %p70
      %s73 = sadd.s32 %s72, 1
      %p76 = scmp.eq.s32.totalorder %s24, 1
      %p77 = scmp.ne.s32.totalorder %s72, %s74
      %p78 = scmp.eq.s32.totalorder %s24, 0
      %p79 = por %p77, %p78
      %p80 = scmp.ne.s32.totalorder %s72, %s74
      %p81 = scmp.eq.s32.totalorder %s29, 1
      %p82 = por %p80, %p81
      %p83 = scmp.ne.s32.totalorder %s74, %s75
      %p84 = scmp.eq.s32.totalorder %s29, 0
      %p85 = por %p83, %p84
      %p86 = scmp.ne.s32.totalorder %s74, %s75
      %p87 = scmp.eq.s32.totalorder %s30, 1
      %p88 = por %p86, %p87
      %p90 = scmp.ne.s32.totalorder %s75, %s89
      %p91 = scmp.eq.s32.totalorder %s30, 0
      %p92 = por %p90, %p91
      %s94 = sadd.s32 %s93, 1
      %p97 = scmp.eq.s32.totalorder %s24, 1
      %p98 = scmp.ne.s32.totalorder %s93, %s95
      %p99 = scmp.eq.s32.totalorder %s24, 0
      %p100 = por %p98, %p99
      %p101 = scmp.ne.s32.totalorder %s93, %s95
      %p102 = scmp.eq.s32.totalorder %s29, 1
      %p103 = por %p101, %p102
      %p104 = scmp.ne.s32.totalorder %s95, %s96
      %p105 = scmp.eq.s32.totalorder %s29, 0
      %p106 = por %p104, %p105
      %p107 = scmp.ne.s32.totalorder %s95, %s96
      %p108 = scmp.eq.s32.totalorder %s30, 1
      %p109 = por %p107, %p108
      %p111 = scmp.ne.s32.totalorder %s96, %s110
      %p112 = scmp.eq.s32.totalorder %s30, 0
      %p113 = por %p111, %p112
      %s114 = ssub.s32 %s31, %s43
      %s115 = ssub.s32 %s32, %s39
      %s116 = sor.u32 %s114, %s115
      %p117 = scmp.eq.s32.totalorder %s116, 0
      %s119 = sadd.s32 %s118, 1
      %s120 = scalar_select %p117, %s118, %s119
      %p123 = pneg %p117
      %p124 = scmp.eq.s32.totalorder %s24, 1
      %p125 = por %p123, %p124
      %p126 = scmp.ne.s32.totalorder %s118, %s121
      %p127 = scmp.eq.s32.totalorder %s24, 0
      %p128 = por %p126, %p127
      %p129 = scmp.ne.s32.totalorder %s118, %s121
      %p130 = scmp.eq.s32.totalorder %s29, 1
      %p131 = por %p129, %p130
      %p132 = scmp.ne.s32.totalorder %s121, %s122
      %p133 = scmp.eq.s32.totalorder %s29, 0
      %p134 = por %p132, %p133
      %p135 = scmp.ne.s32.totalorder %s121, %s122
      %p136 = scmp.eq.s32.totalorder %s30, 1
      %p137 = por %p135, %p136
      %p139 = scmp.ne.s32.totalorder %s122, %s138
      %p140 = scmp.eq.s32.totalorder %s30, 0
      %p141 = por %p139, %p140
      %s142 = ssub.s32 %s31, %s43
      %p143 = scmp.eq.s32.totalorder %s142, 0
      %s145 = sadd.s32 %s144, 1
      %s146 = scalar_select %p143, %s144, %s145
      %p149 = pneg %p143
      %p150 = scmp.eq.s32.totalorder %s24, 1
      %p151 = por %p149, %p150
      %p152 = scmp.ne.s32.totalorder %s144, %s147
      %p153 = scmp.eq.s32.totalorder %s24, 0
      %p154 = por %p152, %p153
      %p155 = scmp.ne.s32.totalorder %s144, %s147
      %p156 = scmp.eq.s32.totalorder %s29, 1
      %p157 = por %p155, %p156
      %p158 = scmp.ne.s32.totalorder %s147, %s148
      %p159 = scmp.eq.s32.totalorder %s29, 0
      %p160 = por %p158, %p159
      %p161 = scmp.ne.s32.totalorder %s147, %s148
      %p162 = scmp.eq.s32.totalorder %s30, 1
      %p163 = por %p161, %p162
      %p165 = scmp.ne.s32.totalorder %s148, %s164
      %p166 = scmp.eq.s32.totalorder %s30, 0
      %p167 = por %p165, %p166
      %s168 = ssub.s32 %s31, %s43
      %p169 = scmp.eq.s32.totalorder %s168, 0
      %s171 = sadd.s32 %s170, 1
      %s172 = scalar_select %p169, %s170, %s171
      %p175 = pneg %p169
      %p176 = scmp.eq.s32.totalorder %s24, 1
      %p177 = por %p175, %p176
      %p178 = scmp.ne.s32.totalorder %s170, %s173
      %p179 = scmp.eq.s32.totalorder %s24, 0
      %p180 = por %p178, %p179
      %p181 = scmp.ne.s32.totalorder %s170, %s173
      %p182 = scmp.eq.s32.totalorder %s29, 1
      %p183 = por %p181, %p182
      %p184 = scmp.ne.s32.totalorder %s173, %s174
      %p185 = scmp.eq.s32.totalorder %s29, 0
      %p186 = por %p184, %p185
      %p187 = scmp.ne.s32.totalorder %s173, %s174
      %p188 = scmp.eq.s32.totalorder %s30, 1
      %p189 = por %p187, %p188
      %p191 = scmp.ne.s32.totalorder %s174, %s190
      %p192 = scmp.eq.s32.totalorder %s30, 0
      %p193 = por %p191, %p192
      %p194 = scmp.le.s32.totalorder 1, %s24
      %p195 = scmp.lt.s32.totalorder %s24, 3
      %p196 = pnand %p194, %p195
      %p197 = pneg %p196
      // Predicated region
      $region9: #{tpu_custom_call.1} parent=5 // pred_check
        _
      $region10: #{tpu_custom_call.1} parent=5 // pred_check_branch
        %199 = sbr.rel (%p196) target = $region12
      $region11: #{tpu_custom_call.1} parent=5 // pred_region
        %s200 = ssub.s32 %s24, 1
        // Predicated region
        $region13: #{tpu_custom_call.1} parent=11 // pred_check
          %p201 = pneg %p85
        $region14: #{tpu_custom_call.1} parent=11 // pred_check_branch
          %203 = sbr.rel (%p201) target = $region16
        $region15: #{tpu_custom_call.1} parent=11 // pred_region
          %s205 = ssub.s32 1024, 1024
          %206 = vsyncadd [#allocation9], %s205
          %s207 = sshll.u32 [#allocation8], 4
          %s208 = int_to_ptr.vmem [resolvable:$true] %s207
          %213 = dma.hbm_to_vmem [thread:$0]  %s2, 1024, %s208, [#allocation9], 128, 128, 8
        $region16: #{tpu_custom_call.1} parent=11 // pred_fallthru
          _
        // Predicated region
        $region17: #{tpu_custom_call.1} parent=11 // pred_check
          %p214 = pneg %p106
        $region18: #{tpu_custom_call.1} parent=11 // pred_check_branch
          %216 = sbr.rel (%p214) target = $region20
        $region19: #{tpu_custom_call.1} parent=11 // pred_region
          _
        $region20: #{tpu_custom_call.1} parent=11 // pred_fallthru
          _
      $region12: #{tpu_custom_call.1} parent=5 // pred_fallthru
        _
      %p217 = scmp.lt.s32.totalorder %s24, 2
      // Predicated region
      $region21: #{tpu_custom_call.1} parent=5 // pred_check
        %p218 = pneg %p217
      $region22: #{tpu_custom_call.1} parent=5 // pred_check_branch
        %220 = sbr.rel (%p218) target = $region24
      $region23: #{tpu_custom_call.1} parent=5 // pred_region
        // Predicated region
        $region25: #{tpu_custom_call.1} parent=23 // pred_check
          %p221 = pneg %p58
        $region26: #{tpu_custom_call.1} parent=23 // pred_check_branch
          %223 = sbr.rel (%p221) target = $region28
        $region27: #{tpu_custom_call.1} parent=23 // pred_region
          %s224 = sand.u32 %s48, 1
          %s225 = scalar_lea.sflag [#allocation6], %s224
          %s226 = sand.u32 %s48, 1
          %s227 = smul.addr %s226, 8
          %s228 = scalar_lea.vmem [#allocation5], %s227
          %s230 = ssub.s32 128, 128
          %231 = vsyncadd %s225, %s230
          %s232 = sadd.s32 %s32, %s31
          %s233 = smul.addr %s232, 128
          %s234 = scalar_lea.hbm %s1, %s233
          %s236 = sshll.u32 %s228, 4
          %s237 = int_to_ptr.vmem [resolvable:$true] %s236
          %239 = dma.hbm_to_vmem [thread:$0]  %s234, 128, %s237, %s225
        $region28: #{tpu_custom_call.1} parent=23 // pred_fallthru
          _
      $region24: #{tpu_custom_call.1} parent=5 // pred_fallthru
        _
      %p240 = scmp.le.s32.totalorder 1, %s24
      %p241 = scmp.lt.s32.totalorder %s24, 3
      %p242 = pnand %p240, %p241
      %p243 = pneg %p242
      // Predicated region
      $region29: #{tpu_custom_call.1} parent=5 // pred_check
        _
      $region30: #{tpu_custom_call.1} parent=5 // pred_check_branch
        %245 = sbr.rel (%p242) target = $region32
      $region31: #{tpu_custom_call.1} parent=5 // pred_region
        %s246 = ssub.s32 %s24, 1
        %s247 = sand.u32 %s51, 1
        %s248 = scalar_lea.sflag [#allocation6], %s247
        %s249 = sand.u32 %s51, 1
        %s250 = smul.addr %s249, 8
        %s251 = scalar_lea.vmem [#allocation5], %s250
        // Predicated region
        $region33: #{tpu_custom_call.1} parent=31 // pred_check
          %p252 = pneg %p64
        $region34: #{tpu_custom_call.1} parent=31 // pred_check_branch
          %254 = sbr.rel (%p252) target = $region36
        $region35: #{tpu_custom_call.1} parent=31 // pred_region
          %255 = dma.done %s248, 128
        $region36: #{tpu_custom_call.1} parent=31 // pred_fallthru
          _
        // Predicated region
        $region37: #{tpu_custom_call.1} parent=31 // pred_check
          %p256 = pneg %p85
        $region38: #{tpu_custom_call.1} parent=31 // pred_check_branch
          %258 = sbr.rel (%p256) target = $region40
        $region39: #{tpu_custom_call.1} parent=31 // pred_region
          %259 = dma.done [#allocation9], 1024
        $region40: #{tpu_custom_call.1} parent=31 // pred_fallthru
          _
        %s260 = sand.u32 %s51, 1
        %s261 = scalar_lea.sflag [#allocation6], %s260
        %s262 = sand.u32 %s51, 1
        %s263 = smul.addr %s262, 8
        %s264 = scalar_lea.vmem [#allocation5], %s263
        %p265 = pneg %p64
        %p266 = pneg %p61
        %p267 = pneg %p85
        %p268 = pneg %p82
        %p269 = pneg %p106
        %p270 = pneg %p103
        %p271 = pneg %p134
        %p272 = pneg %p131
        %s273 = sand.u32 %s121, 1
        %s274 = scalar_lea.sflag [#allocation7], %s273
        %s275 = sand.u32 %s121, 1
        %s276 = smul.addr %s275, 8
        %s277 = scalar_lea.vmem [#allocation10], %s276
        %p278 = pneg %p160
        %p279 = pneg %p157
        %p280 = scmp.lt.s32.totalorder %s33, 1
        %s281 = scalar_select %p280, %s33, 1
        %s282 = scalar_lea.vmem %s5, %s281
        %p283 = pneg %p186
        %p284 = pneg %p183
        %p285 = scmp.lt.s32.totalorder %s33, 1
        %s286 = scalar_select %p285, %s33, 1
        %s287 = scalar_lea.vmem %s6, %s286
        %p288 = scmp.lt.s32.totalorder %s33, 1
        %s289 = scalar_select %p288, %s33, 1
        %s290 = scalar_lea.vmem %s5, %s289
        %p291 = scmp.lt.s32.totalorder %s33, 1
        %s292 = scalar_select %p291, %s33, 1
        %s293 = scalar_lea.vmem %s6, %s292
        %s294 = sld [smem:[#allocation4 + %s33]]
        %p295 = scmp.eq.s32.totalorder %s34, 0
        // Predicated region
        $region41: #{tpu_custom_call.1} parent=31 // pred_check
          %p296 = pneg %p295
        $region42: #{tpu_custom_call.1} parent=31 // pred_check_branch
          %298 = sbr.rel (%p296) target = $region44
        $region43: #{tpu_custom_call.1} parent=31 // pred_region
          %v299 = vlaneseq
          %v300 = vand.u32 %v299, 127
          %vm301 = vcmp.eq.s32.totalorder %v300, 1
          %v302 = vsel %vm301, 0.0, -10000.0
          %303 = vst [vmem:[#allocation2] sm:$0x1] %v302
        $region44: #{tpu_custom_call.1} parent=31 // pred_fallthru
          _
        %v304 = vld [vmem:[#allocation8] sm:$0xff]
        %v305 = vld [vmem:[#allocation8 + $0x8] sm:$0xff]
        %v306 = vld [vmem:[#allocation8 + $0x10] sm:$0xff]
        %v307 = vld [vmem:[#allocation8 + $0x18] sm:$0xff]
        %v308 = vld [vmem:[#allocation8 + $0x20] sm:$0xff]
        %v309 = vld [vmem:[#allocation8 + $0x28] sm:$0xff]
        %v310 = vld [vmem:[#allocation8 + $0x30] sm:$0xff]
        %v311 = vld [vmem:[#allocation8 + $0x38] sm:$0xff]
        %v312 = vlaneseq
        %v313 = vshrl.u32 %v312, 7
        %v314 = vadd.s32 %v313, 8
        %v315 = vadd.s32 %v313, 16
        %v316 = vadd.s32 %v313, 24
        %v317 = vadd.s32 %v313, 32
        %v318 = vadd.s32 %v313, 40
        %v319 = vadd.s32 %v313, 48
        %v320 = vadd.s32 %v313, 56
        %s321 = smul.u32 %s34, 8
        %v322 = vld [vmem:[#allocation2] sm:$0x1]
        %v323 = vld [vmem:[%s251] sm:$0xff]
        %v324 = vlaneseq
        %v325 = vshrl.u32 %v324, 7
        %v326 = vsub.s32 0, %v325
        %v327 = vrot.slane %v322, %v326
        %329 = vbcast.lane.b32.xlu0 %v327, 256
        %v330 = vpop.permute.xlu0 %329
        %s332 = sor.u32 256, 8
        %333 = vbcast.lane.b32.xlu0 %v327, %s332
        %v334 = vpop.permute.xlu0 %333
        %s336 = sor.u32 256, 16
        %337 = vbcast.lane.b32.xlu0 %v327, %s336
        %v338 = vpop.permute.xlu0 %337
        %s340 = sor.u32 256, 24
        %341 = vbcast.lane.b32.xlu0 %v327, %s340
        %v342 = vpop.permute.xlu0 %341
        %s344 = sor.u32 256, 32
        %345 = vbcast.lane.b32.xlu0 %v327, %s344
        %v346 = vpop.permute.xlu0 %345
        %s348 = sor.u32 256, 40
        %349 = vbcast.lane.b32.xlu0 %v327, %s348
        %v350 = vpop.permute.xlu0 %349
        %s352 = sor.u32 256, 48
        %353 = vbcast.lane.b32.xlu0 %v327, %s352
        %v354 = vpop.permute.xlu0 %353
        %s356 = sor.u32 256, 56
        %357 = vbcast.lane.b32.xlu0 %v327, %s356
        %v358 = vpop.permute.xlu0 %357
        %v359 = vadd.f32 %v330, %v304
        %v360 = vadd.f32 %v334, %v305
        %v361 = vadd.f32 %v338, %v306
        %v362 = vadd.f32 %v342, %v307
        %v363 = vadd.f32 %v346, %v308
        %v364 = vadd.f32 %v350, %v309
        %v365 = vadd.f32 %v354, %v310
        %v366 = vadd.f32 %v358, %v311
        %v367 = vmax.f32 %v359, %v363
        %v368 = vmax.f32 %v360, %v364
        %v369 = vmax.f32 %v361, %v365
        %v370 = vmax.f32 %v362, %v366
        %v371 = vmax.f32 %v367, %v368
        %v372 = vmax.f32 %v369, %v370
        %v373 = vmax.f32 %v371, %v372
        %v374 = vrot.slane %v373, 4
        %v375 = vmax.f32 %v373, %v374
        %v376 = vrot.slane %v375, 2
        %v377 = vmax.f32 %v375, %v376
        %v378 = vrot.slane %v377, 1
        %v379 = vmax.f32 %v377, %v378
        %vm380 = vcmp.eq.f32.partialorder %v359, %v379
        %vm381 = vcmp.eq.f32.partialorder %v360, %v379
        %vm382 = vcmp.eq.f32.partialorder %v361, %v379
        %vm383 = vcmp.eq.f32.partialorder %v362, %v379
        %vm384 = vcmp.eq.f32.partialorder %v363, %v379
        %vm385 = vcmp.eq.f32.partialorder %v364, %v379
        %vm386 = vcmp.eq.f32.partialorder %v365, %v379
        %vm387 = vcmp.eq.f32.partialorder %v366, %v379
        %v388 = vsel %vm380, %v313, 64
        %v389 = vsel %vm381, %v314, 64
        %v390 = vsel %vm382, %v315, 64
        %v391 = vsel %vm383, %v316, 64
        %v392 = vsel %vm384, %v317, 64
        %v393 = vsel %vm385, %v318, 64
        %v394 = vsel %vm386, %v319, 64
        %v395 = vsel %vm387, %v320, 64
        %vm396 = vcmp.lt.s32.totalorder %v388, %v392
        %v397 = vsel %vm396, %v388, %v392
        %vm398 = vcmp.lt.s32.totalorder %v389, %v393
        %v399 = vsel %vm398, %v389, %v393
        %vm400 = vcmp.lt.s32.totalorder %v390, %v394
        %v401 = vsel %vm400, %v390, %v394
        %vm402 = vcmp.lt.s32.totalorder %v391, %v395
        %v403 = vsel %vm402, %v391, %v395
        %vm404 = vcmp.lt.s32.totalorder %v397, %v399
        %v405 = vsel %vm404, %v397, %v399
        %vm406 = vcmp.lt.s32.totalorder %v401, %v403
        %v407 = vsel %vm406, %v401, %v403
        %vm408 = vcmp.lt.s32.totalorder %v405, %v407
        %v409 = vsel %vm408, %v405, %v407
        %v410 = vrot.slane %v409, 4
        %vm411 = vcmp.lt.s32.totalorder %v409, %v410
        %v412 = vsel %vm411, %v409, %v410
        %v413 = vrot.slane %v412, 2
        %vm414 = vcmp.lt.s32.totalorder %v412, %v413
        %v415 = vsel %vm414, %v412, %v413
        %v416 = vrot.slane %v415, 1
        %vm417 = vcmp.lt.s32.totalorder %v415, %v416
        %v418 = vsel %vm417, %v415, %v416
        %v419 = vadd.f32 %v379, %v323
        %s420 = sadd.s32 %s321, 0
        %p421 = scmp.lt.s32.totalorder %s420, %s294
        %s422 = scalar_select %p421, 1, 0
        %v423 = vstv %s422
        %vm424 = vcmp.eq.s32.totalorder %v423, 1
        %v425 = vsel %vm424, %v419, %v322
        %v426 = vlaneseq
        %v427 = vshrl.u32 %v426, 7
        %v428 = vsub.s32 0, %v427
        %v429 = vrot.slane %v425, %v428
        %431 = vbcast.lane.b32.xlu0 %v429, 256
        %v432 = vpop.permute.xlu0 %431
        %s434 = sor.u32 256, 8
        %435 = vbcast.lane.b32.xlu0 %v429, %s434
        %v436 = vpop.permute.xlu0 %435
        %s438 = sor.u32 256, 16
        %439 = vbcast.lane.b32.xlu0 %v429, %s438
        %v440 = vpop.permute.xlu0 %439
        %s442 = sor.u32 256, 24
        %443 = vbcast.lane.b32.xlu0 %v429, %s442
        %v444 = vpop.permute.xlu0 %443
        %s446 = sor.u32 256, 32
        %447 = vbcast.lane.b32.xlu0 %v429, %s446
        %v448 = vpop.permute.xlu0 %447
        %s450 = sor.u32 256, 40
        %451 = vbcast.lane.b32.xlu0 %v429, %s450
        %v452 = vpop.permute.xlu0 %451
        %s454 = sor.u32 256, 48
        %455 = vbcast.lane.b32.xlu0 %v429, %s454
        %v456 = vpop.permute.xlu0 %455
        %s458 = sor.u32 256, 56
        %459 = vbcast.lane.b32.xlu0 %v429, %s458
        %v460 = vpop.permute.xlu0 %459
        %v461 = vadd.f32 %v432, %v304
        %v462 = vadd.f32 %v436, %v305
        %v463 = vadd.f32 %v440, %v306
        %v464 = vadd.f32 %v444, %v307
        %v465 = vadd.f32 %v448, %v308
        %v466 = vadd.f32 %v452, %v309
        %v467 = vadd.f32 %v456, %v310
        %v468 = vadd.f32 %v460, %v311
        %v469 = vmax.f32 %v461, %v465
        %v470 = vmax.f32 %v462, %v466
        %v471 = vmax.f32 %v463, %v467
        %v472 = vmax.f32 %v464, %v468
        %v473 = vmax.f32 %v469, %v470
        %v474 = vmax.f32 %v471, %v472
        %v475 = vmax.f32 %v473, %v474
        %v476 = vrot.slane %v475, 4
        %v477 = vmax.f32 %v475, %v476
        %v478 = vrot.slane %v477, 2
        %v479 = vmax.f32 %v477, %v478
        %v480 = vrot.slane %v479, 1
        %v481 = vmax.f32 %v479, %v480
        %vm482 = vcmp.eq.f32.partialorder %v461, %v481
        %vm483 = vcmp.eq.f32.partialorder %v462, %v481
        %vm484 = vcmp.eq.f32.partialorder %v463, %v481
        %vm485 = vcmp.eq.f32.partialorder %v464, %v481
        %vm486 = vcmp.eq.f32.partialorder %v465, %v481
        %vm487 = vcmp.eq.f32.partialorder %v466, %v481
        %vm488 = vcmp.eq.f32.partialorder %v467, %v481
        %vm489 = vcmp.eq.f32.partialorder %v468, %v481
        %v490 = vsel %vm482, %v313, 64
        %v491 = vsel %vm483, %v314, 64
        %v492 = vsel %vm484, %v315, 64
        %v493 = vsel %vm485, %v316, 64
        %v494 = vsel %vm486, %v317, 64
        %v495 = vsel %vm487, %v318, 64
        %v496 = vsel %vm488, %v319, 64
        %v497 = vsel %vm489, %v320, 64
        %vm498 = vcmp.lt.s32.totalorder %v490, %v494
        %v499 = vsel %vm498, %v490, %v494
        %vm500 = vcmp.lt.s32.totalorder %v491, %v495
        %v501 = vsel %vm500, %v491, %v495
        %vm502 = vcmp.lt.s32.totalorder %v492, %v496
        %v503 = vsel %vm502, %v492, %v496
        %vm504 = vcmp.lt.s32.totalorder %v493, %v497
        %v505 = vsel %vm504, %v493, %v497
        %vm506 = vcmp.lt.s32.totalorder %v499, %v501
        %v507 = vsel %vm506, %v499, %v501
        %vm508 = vcmp.lt.s32.totalorder %v503, %v505
        %v509 = vsel %vm508, %v503, %v505
        %vm510 = vcmp.lt.s32.totalorder %v507, %v509
        %v511 = vsel %vm510, %v507, %v509
        %v512 = vrot.slane %v511, 4
        %vm513 = vcmp.lt.s32.totalorder %v511, %v512
        %v514 = vsel %vm513, %v511, %v512
        %v515 = vrot.slane %v514, 2
        %vm516 = vcmp.lt.s32.totalorder %v514, %v515
        %v517 = vsel %vm516, %v514, %v515
        %v518 = vrot.slane %v517, 1
        %vm519 = vcmp.lt.s32.totalorder %v517, %v518
        %v520 = vsel %vm519, %v517, %v518
        %v521 = vadd.f32 %v481, %v323
        %s522 = sadd.s32 %s420, 1
        %p523 = scmp.lt.s32.totalorder %s522, %s294
        %s524 = scalar_select %p523, 1, 0
        %v525 = vstv %s524
        %vm526 = vcmp.eq.s32.totalorder %v525, 1
        %v528 = vrot.slane %v425, 7
        %v530 = vsel %vm526, %v521, %v528
        %v531 = vlaneseq
        %v532 = vshrl.u32 %v531, 7
        %v533 = vsub.s32 1, %v532
        %v534 = vrot.slane %v530, %v533
        %536 = vbcast.lane.b32.xlu0 %v534, 256
        %v537 = vpop.permute.xlu0 %536
        %s539 = sor.u32 256, 8
        %540 = vbcast.lane.b32.xlu0 %v534, %s539
        %v541 = vpop.permute.xlu0 %540
        %s543 = sor.u32 256, 16
        %544 = vbcast.lane.b32.xlu0 %v534, %s543
        %v545 = vpop.permute.xlu0 %544
        %s547 = sor.u32 256, 24
        %548 = vbcast.lane.b32.xlu0 %v534, %s547
        %v549 = vpop.permute.xlu0 %548
        %s551 = sor.u32 256, 32
        %552 = vbcast.lane.b32.xlu0 %v534, %s551
        %v553 = vpop.permute.xlu0 %552
        %s555 = sor.u32 256, 40
        %556 = vbcast.lane.b32.xlu0 %v534, %s555
        %v557 = vpop.permute.xlu0 %556
        %s559 = sor.u32 256, 48
        %560 = vbcast.lane.b32.xlu0 %v534, %s559
        %v561 = vpop.permute.xlu0 %560
        %s563 = sor.u32 256, 56
        %564 = vbcast.lane.b32.xlu0 %v534, %s563
        %v565 = vpop.permute.xlu0 %564
        %v566 = vadd.f32 %v537, %v304
        %v567 = vadd.f32 %v541, %v305
        %v568 = vadd.f32 %v545, %v306
        %v569 = vadd.f32 %v549, %v307
        %v570 = vadd.f32 %v553, %v308
        %v571 = vadd.f32 %v557, %v309
        %v572 = vadd.f32 %v561, %v310
        %v573 = vadd.f32 %v565, %v311
        %v574 = vmax.f32 %v566, %v570
        %v575 = vmax.f32 %v567, %v571
        %v576 = vmax.f32 %v568, %v572
        %v577 = vmax.f32 %v569, %v573
        %v578 = vmax.f32 %v574, %v575
        %v579 = vmax.f32 %v576, %v577
        %v580 = vmax.f32 %v578, %v579
        %v581 = vrot.slane %v580, 4
        %v582 = vmax.f32 %v580, %v581
        %v583 = vrot.slane %v582, 2
        %v584 = vmax.f32 %v582, %v583
        %v585 = vrot.slane %v584, 1
        %v586 = vmax.f32 %v584, %v585
        %vm587 = vcmp.eq.f32.partialorder %v566, %v586
        %vm588 = vcmp.eq.f32.partialorder %v567, %v586
        %vm589 = vcmp.eq.f32.partialorder %v568, %v586
        %vm590 = vcmp.eq.f32.partialorder %v569, %v586
        %vm591 = vcmp.eq.f32.partialorder %v570, %v586
        %vm592 = vcmp.eq.f32.partialorder %v571, %v586
        %vm593 = vcmp.eq.f32.partialorder %v572, %v586
        %vm594 = vcmp.eq.f32.partialorder %v573, %v586
        %v595 = vsel %vm587, %v313, 64
        %v596 = vsel %vm588, %v314, 64
        %v597 = vsel %vm589, %v315, 64
        %v598 = vsel %vm590, %v316, 64
        %v599 = vsel %vm591, %v317, 64
        %v600 = vsel %vm592, %v318, 64
        %v601 = vsel %vm593, %v319, 64
        %v602 = vsel %vm594, %v320, 64
        %vm603 = vcmp.lt.s32.totalorder %v595, %v599
        %v604 = vsel %vm603, %v595, %v599
        %vm605 = vcmp.lt.s32.totalorder %v596, %v600
        %v606 = vsel %vm605, %v596, %v600
        %vm607 = vcmp.lt.s32.totalorder %v597, %v601
        %v608 = vsel %vm607, %v597, %v601
        %vm609 = vcmp.lt.s32.totalorder %v598, %v602
        %v610 = vsel %vm609, %v598, %v602
        %vm611 = vcmp.lt.s32.totalorder %v604, %v606
        %v612 = vsel %vm611, %v604, %v606
        %vm613 = vcmp.lt.s32.totalorder %v608, %v610
        %v614 = vsel %vm613, %v608, %v610
        %vm615 = vcmp.lt.s32.totalorder %v612, %v614
        %v616 = vsel %vm615, %v612, %v614
        %v617 = vrot.slane %v616, 4
        %vm618 = vcmp.lt.s32.totalorder %v616, %v617
        %v619 = vsel %vm618, %v616, %v617
        %v620 = vrot.slane %v619, 2
        %vm621 = vcmp.lt.s32.totalorder %v619, %v620
        %v622 = vsel %vm621, %v619, %v620
        %v623 = vrot.slane %v622, 1
        %vm624 = vcmp.lt.s32.totalorder %v622, %v623
        %v625 = vsel %vm624, %v622, %v623
        %v626 = vadd.f32 %v586, %v323
        %s627 = sadd.s32 %s420, 2
        %p628 = scmp.lt.s32.totalorder %s627, %s294
        %s629 = scalar_select %p628, 1, 0
        %v630 = vstv %s629
        %vm631 = vcmp.eq.s32.totalorder %v630, 1
        %v633 = vrot.slane %v530, 7
        %v635 = vsel %vm631, %v626, %v633
        %v636 = vlaneseq
        %v637 = vshrl.u32 %v636, 7
        %v638 = vsub.s32 2, %v637
        %v639 = vrot.slane %v635, %v638
        %641 = vbcast.lane.b32.xlu0 %v639, 256
        %v642 = vpop.permute.xlu0 %641
        %s644 = sor.u32 256, 8
        %645 = vbcast.lane.b32.xlu0 %v639, %s644
        %v646 = vpop.permute.xlu0 %645
        %s648 = sor.u32 256, 16
        %649 = vbcast.lane.b32.xlu0 %v639, %s648
        %v650 = vpop.permute.xlu0 %649
        %s652 = sor.u32 256, 24
        %653 = vbcast.lane.b32.xlu0 %v639, %s652
        %v654 = vpop.permute.xlu0 %653
        %s656 = sor.u32 256, 32
        %657 = vbcast.lane.b32.xlu0 %v639, %s656
        %v658 = vpop.permute.xlu0 %657
        %s660 = sor.u32 256, 40
        %661 = vbcast.lane.b32.xlu0 %v639, %s660
        %v662 = vpop.permute.xlu0 %661
        %s664 = sor.u32 256, 48
        %665 = vbcast.lane.b32.xlu0 %v639, %s664
        %v666 = vpop.permute.xlu0 %665
        %s668 = sor.u32 256, 56
        %669 = vbcast.lane.b32.xlu0 %v639, %s668
        %v670 = vpop.permute.xlu0 %669
        %v671 = vadd.f32 %v642, %v304
        %v672 = vadd.f32 %v646, %v305
        %v673 = vadd.f32 %v650, %v306
        %v674 = vadd.f32 %v654, %v307
        %v675 = vadd.f32 %v658, %v308
        %v676 = vadd.f32 %v662, %v309
        %v677 = vadd.f32 %v666, %v310
        %v678 = vadd.f32 %v670, %v311
        %v679 = vmax.f32 %v671, %v675
        %v680 = vmax.f32 %v672, %v676
        %v681 = vmax.f32 %v673, %v677
        %v682 = vmax.f32 %v674, %v678
        %v683 = vmax.f32 %v679, %v680
        %v684 = vmax.f32 %v681, %v682
        %v685 = vmax.f32 %v683, %v684
        %v686 = vrot.slane %v685, 4
        %v687 = vmax.f32 %v685, %v686
        %v688 = vrot.slane %v687, 2
        %v689 = vmax.f32 %v687, %v688
        %v690 = vrot.slane %v689, 1
        %v691 = vmax.f32 %v689, %v690
        %vm692 = vcmp.eq.f32.partialorder %v671, %v691
        %vm693 = vcmp.eq.f32.partialorder %v672, %v691
        %vm694 = vcmp.eq.f32.partialorder %v673, %v691
        %vm695 = vcmp.eq.f32.partialorder %v674, %v691
        %vm696 = vcmp.eq.f32.partialorder %v675, %v691
        %vm697 = vcmp.eq.f32.partialorder %v676, %v691
        %vm698 = vcmp.eq.f32.partialorder %v677, %v691
        %vm699 = vcmp.eq.f32.partialorder %v678, %v691
        %v700 = vsel %vm692, %v313, 64
        %v701 = vsel %vm693, %v314, 64
        %v702 = vsel %vm694, %v315, 64
        %v703 = vsel %vm695, %v316, 64
        %v704 = vsel %vm696, %v317, 64
        %v705 = vsel %vm697, %v318, 64
        %v706 = vsel %vm698, %v319, 64
        %v707 = vsel %vm699, %v320, 64
        %vm708 = vcmp.lt.s32.totalorder %v700, %v704
        %v709 = vsel %vm708, %v700, %v704
        %vm710 = vcmp.lt.s32.totalorder %v701, %v705
        %v711 = vsel %vm710, %v701, %v705
        %vm712 = vcmp.lt.s32.totalorder %v702, %v706
        %v713 = vsel %vm712, %v702, %v706
        %vm714 = vcmp.lt.s32.totalorder %v703, %v707
        %v715 = vsel %vm714, %v703, %v707
        %vm716 = vcmp.lt.s32.totalorder %v709, %v711
        %v717 = vsel %vm716, %v709, %v711
        %vm718 = vcmp.lt.s32.totalorder %v713, %v715
        %v719 = vsel %vm718, %v713, %v715
        %vm720 = vcmp.lt.s32.totalorder %v717, %v719
        %v721 = vsel %vm720, %v717, %v719
        %v722 = vrot.slane %v721, 4
        %vm723 = vcmp.lt.s32.totalorder %v721, %v722
        %v724 = vsel %vm723, %v721, %v722
        %v725 = vrot.slane %v724, 2
        %vm726 = vcmp.lt.s32.totalorder %v724, %v725
        %v727 = vsel %vm726, %v724, %v725
        %v728 = vrot.slane %v727, 1
        %vm729 = vcmp.lt.s32.totalorder %v727, %v728
        %v730 = vsel %vm729, %v727, %v728
        %v731 = vadd.f32 %v691, %v323
        %s732 = sadd.s32 %s420, 3
        %p733 = scmp.lt.s32.totalorder %s732, %s294
        %s734 = scalar_select %p733, 1, 0
        %v735 = vstv %s734
        %vm736 = vcmp.eq.s32.totalorder %v735, 1
        %v738 = vrot.slane %v635, 7
        %v740 = vsel %vm736, %v731, %v738
        %v741 = vlaneseq
        %v742 = vshrl.u32 %v741, 7
        %v743 = vsub.s32 3, %v742
        %v744 = vrot.slane %v740, %v743
        %746 = vbcast.lane.b32.xlu0 %v744, 256
        %v747 = vpop.permute.xlu0 %746
        %s749 = sor.u32 256, 8
        %750 = vbcast.lane.b32.xlu0 %v744, %s749
        %v751 = vpop.permute.xlu0 %750
        %s753 = sor.u32 256, 16
        %754 = vbcast.lane.b32.xlu0 %v744, %s753
        %v755 = vpop.permute.xlu0 %754
        %s757 = sor.u32 256, 24
        %758 = vbcast.lane.b32.xlu0 %v744, %s757
        %v759 = vpop.permute.xlu0 %758
        %s761 = sor.u32 256, 32
        %762 = vbcast.lane.b32.xlu0 %v744, %s761
        %v763 = vpop.permute.xlu0 %762
        %s765 = sor.u32 256, 40
        %766 = vbcast.lane.b32.xlu0 %v744, %s765
        %v767 = vpop.permute.xlu0 %766
        %s769 = sor.u32 256, 48
        %770 = vbcast.lane.b32.xlu0 %v744, %s769
        %v771 = vpop.permute.xlu0 %770
        %s773 = sor.u32 256, 56
        %774 = vbcast.lane.b32.xlu0 %v744, %s773
        %v775 = vpop.permute.xlu0 %774
        %v776 = vadd.f32 %v747, %v304
        %v777 = vadd.f32 %v751, %v305
        %v778 = vadd.f32 %v755, %v306
        %v779 = vadd.f32 %v759, %v307
        %v780 = vadd.f32 %v763, %v308
        %v781 = vadd.f32 %v767, %v309
        %v782 = vadd.f32 %v771, %v310
        %v783 = vadd.f32 %v775, %v311
        %v784 = vmax.f32 %v776, %v780
        %v785 = vmax.f32 %v777, %v781
        %v786 = vmax.f32 %v778, %v782
        %v787 = vmax.f32 %v779, %v783
        %v788 = vmax.f32 %v784, %v785
        %v789 = vmax.f32 %v786, %v787
        %v790 = vmax.f32 %v788, %v789
        %v791 = vrot.slane %v790, 4
        %v792 = vmax.f32 %v790, %v791
        %v793 = vrot.slane %v792, 2
        %v794 = vmax.f32 %v792, %v793
        %v795 = vrot.slane %v794, 1
        %v796 = vmax.f32 %v794, %v795
        %vm797 = vcmp.eq.f32.partialorder %v776, %v796
        %vm798 = vcmp.eq.f32.partialorder %v777, %v796
        %vm799 = vcmp.eq.f32.partialorder %v778, %v796
        %vm800 = vcmp.eq.f32.partialorder %v779, %v796
        %vm801 = vcmp.eq.f32.partialorder %v780, %v796
        %vm802 = vcmp.eq.f32.partialorder %v781, %v796
        %vm803 = vcmp.eq.f32.partialorder %v782, %v796
        %vm804 = vcmp.eq.f32.partialorder %v783, %v796
        %v805 = vsel %vm797, %v313, 64
        %v806 = vsel %vm798, %v314, 64
        %v807 = vsel %vm799, %v315, 64
        %v808 = vsel %vm800, %v316, 64
        %v809 = vsel %vm801, %v317, 64
        %v810 = vsel %vm802, %v318, 64
        %v811 = vsel %vm803, %v319, 64
        %v812 = vsel %vm804, %v320, 64
        %vm813 = vcmp.lt.s32.totalorder %v805, %v809
        %v814 = vsel %vm813, %v805, %v809
        %vm815 = vcmp.lt.s32.totalorder %v806, %v810
        %v816 = vsel %vm815, %v806, %v810
        %vm817 = vcmp.lt.s32.totalorder %v807, %v811
        %v818 = vsel %vm817, %v807, %v811
        %vm819 = vcmp.lt.s32.totalorder %v808, %v812
        %v820 = vsel %vm819, %v808, %v812
        %vm821 = vcmp.lt.s32.totalorder %v814, %v816
        %v822 = vsel %vm821, %v814, %v816
        %vm823 = vcmp.lt.s32.totalorder %v818, %v820
        %v824 = vsel %vm823, %v818, %v820
        %vm825 = vcmp.lt.s32.totalorder %v822, %v824
        %v826 = vsel %vm825, %v822, %v824
        %v827 = vrot.slane %v826, 4
        %vm828 = vcmp.lt.s32.totalorder %v826, %v827
        %v829 = vsel %vm828, %v826, %v827
        %v830 = vrot.slane %v829, 2
        %vm831 = vcmp.lt.s32.totalorder %v829, %v830
        %v832 = vsel %vm831, %v829, %v830
        %v833 = vrot.slane %v832, 1
        %vm834 = vcmp.lt.s32.totalorder %v832, %v833
        %v835 = vsel %vm834, %v832, %v833
        %v836 = vadd.f32 %v796, %v323
        %s837 = sadd.s32 %s420, 4
        %p838 = scmp.lt.s32.totalorder %s837, %s294
        %s839 = scalar_select %p838, 1, 0
        %v840 = vstv %s839
        %vm841 = vcmp.eq.s32.totalorder %v840, 1
        %v843 = vrot.slane %v740, 7
        %v845 = vsel %vm841, %v836, %v843
        %v846 = vlaneseq
        %v847 = vshrl.u32 %v846, 7
        %v848 = vsub.s32 4, %v847
        %v849 = vrot.slane %v845, %v848
        %851 = vbcast.lane.b32.xlu0 %v849, 256
        %v852 = vpop.permute.xlu0 %851
        %s854 = sor.u32 256, 8
        %855 = vbcast.lane.b32.xlu0 %v849, %s854
        %v856 = vpop.permute.xlu0 %855
        %s858 = sor.u32 256, 16
        %859 = vbcast.lane.b32.xlu0 %v849, %s858
        %v860 = vpop.permute.xlu0 %859
        %s862 = sor.u32 256, 24
        %863 = vbcast.lane.b32.xlu0 %v849, %s862
        %v864 = vpop.permute.xlu0 %863
        %s866 = sor.u32 256, 32
        %867 = vbcast.lane.b32.xlu0 %v849, %s866
        %v868 = vpop.permute.xlu0 %867
        %s870 = sor.u32 256, 40
        %871 = vbcast.lane.b32.xlu0 %v849, %s870
        %v872 = vpop.permute.xlu0 %871
        %s874 = sor.u32 256, 48
        %875 = vbcast.lane.b32.xlu0 %v849, %s874
        %v876 = vpop.permute.xlu0 %875
        %s878 = sor.u32 256, 56
        %879 = vbcast.lane.b32.xlu0 %v849, %s878
        %v880 = vpop.permute.xlu0 %879
        %v881 = vadd.f32 %v852, %v304
        %v882 = vadd.f32 %v856, %v305
        %v883 = vadd.f32 %v860, %v306
        %v884 = vadd.f32 %v864, %v307
        %v885 = vadd.f32 %v868, %v308
        %v886 = vadd.f32 %v872, %v309
        %v887 = vadd.f32 %v876, %v310
        %v888 = vadd.f32 %v880, %v311
        %v889 = vmax.f32 %v881, %v885
        %v890 = vmax.f32 %v882, %v886
        %v891 = vmax.f32 %v883, %v887
        %v892 = vmax.f32 %v884, %v888
        %v893 = vmax.f32 %v889, %v890
        %v894 = vmax.f32 %v891, %v892
        %v895 = vmax.f32 %v893, %v894
        %v896 = vrot.slane %v895, 4
        %v897 = vmax.f32 %v895, %v896
        %v898 = vrot.slane %v897, 2
        %v899 = vmax.f32 %v897, %v898
        %v900 = vrot.slane %v899, 1
        %v901 = vmax.f32 %v899, %v900
        %vm902 = vcmp.eq.f32.partialorder %v881, %v901
        %vm903 = vcmp.eq.f32.partialorder %v882, %v901
        %vm904 = vcmp.eq.f32.partialorder %v883, %v901
        %vm905 = vcmp.eq.f32.partialorder %v884, %v901
        %vm906 = vcmp.eq.f32.partialorder %v885, %v901
        %vm907 = vcmp.eq.f32.partialorder %v886, %v901
        %vm908 = vcmp.eq.f32.partialorder %v887, %v901
        %vm909 = vcmp.eq.f32.partialorder %v888, %v901
        %v910 = vsel %vm902, %v313, 64
        %v911 = vsel %vm903, %v314, 64
        %v912 = vsel %vm904, %v315, 64
        %v913 = vsel %vm905, %v316, 64
        %v914 = vsel %vm906, %v317, 64
        %v915 = vsel %vm907, %v318, 64
        %v916 = vsel %vm908, %v319, 64
        %v917 = vsel %vm909, %v320, 64
        %vm918 = vcmp.lt.s32.totalorder %v910, %v914
        %v919 = vsel %vm918, %v910, %v914
        %vm920 = vcmp.lt.s32.totalorder %v911, %v915
        %v921 = vsel %vm920, %v911, %v915
        %vm922 = vcmp.lt.s32.totalorder %v912, %v916
        %v923 = vsel %vm922, %v912, %v916
        %vm924 = vcmp.lt.s32.totalorder %v913, %v917
        %v925 = vsel %vm924, %v913, %v917
        %vm926 = vcmp.lt.s32.totalorder %v919, %v921
        %v927 = vsel %vm926, %v919, %v921
        %vm928 = vcmp.lt.s32.totalorder %v923, %v925
        %v929 = vsel %vm928, %v923, %v925
        %vm930 = vcmp.lt.s32.totalorder %v927, %v929
        %v931 = vsel %vm930, %v927, %v929
        %v932 = vrot.slane %v931, 4
        %vm933 = vcmp.lt.s32.totalorder %v931, %v932
        %v934 = vsel %vm933, %v931, %v932
        %v935 = vrot.slane %v934, 2
        %vm936 = vcmp.lt.s32.totalorder %v934, %v935
        %v937 = vsel %vm936, %v934, %v935
        %v938 = vrot.slane %v937, 1
        %vm939 = vcmp.lt.s32.totalorder %v937, %v938
        %v940 = vsel %vm939, %v937, %v938
        %v941 = vadd.f32 %v901, %v323
        %s942 = sadd.s32 %s420, 5
        %p943 = scmp.lt.s32.totalorder %s942, %s294
        %s944 = scalar_select %p943, 1, 0
        %v945 = vstv %s944
        %vm946 = vcmp.eq.s32.totalorder %v945, 1
        %v948 = vrot.slane %v845, 7
        %v950 = vsel %vm946, %v941, %v948
        %v951 = vlaneseq
        %v952 = vshrl.u32 %v951, 7
        %v953 = vsub.s32 5, %v952
        %v954 = vrot.slane %v950, %v953
        %956 = vbcast.lane.b32.xlu0 %v954, 256
        %v957 = vpop.permute.xlu0 %956
        %s959 = sor.u32 256, 8
        %960 = vbcast.lane.b32.xlu0 %v954, %s959
        %v961 = vpop.permute.xlu0 %960
        %s963 = sor.u32 256, 16
        %964 = vbcast.lane.b32.xlu0 %v954, %s963
        %v965 = vpop.permute.xlu0 %964
        %s967 = sor.u32 256, 24
        %968 = vbcast.lane.b32.xlu0 %v954, %s967
        %v969 = vpop.permute.xlu0 %968
        %s971 = sor.u32 256, 32
        %972 = vbcast.lane.b32.xlu0 %v954, %s971
        %v973 = vpop.permute.xlu0 %972
        %s975 = sor.u32 256, 40
        %976 = vbcast.lane.b32.xlu0 %v954, %s975
        %v977 = vpop.permute.xlu0 %976
        %s979 = sor.u32 256, 48
        %980 = vbcast.lane.b32.xlu0 %v954, %s979
        %v981 = vpop.permute.xlu0 %980
        %s983 = sor.u32 256, 56
        %984 = vbcast.lane.b32.xlu0 %v954, %s983
        %v985 = vpop.permute.xlu0 %984
        %v986 = vadd.f32 %v957, %v304
        %v987 = vadd.f32 %v961, %v305
        %v988 = vadd.f32 %v965, %v306
        %v989 = vadd.f32 %v969, %v307
        %v990 = vadd.f32 %v973, %v308
        %v991 = vadd.f32 %v977, %v309
        %v992 = vadd.f32 %v981, %v310
        %v993 = vadd.f32 %v985, %v311
        %v994 = vmax.f32 %v986, %v990
        %v995 = vmax.f32 %v987, %v991
        %v996 = vmax.f32 %v988, %v992
        %v997 = vmax.f32 %v989, %v993
        %v998 = vmax.f32 %v994, %v995
        %v999 = vmax.f32 %v996, %v997
        %v1000 = vmax.f32 %v998, %v999
        %v1001 = vrot.slane %v1000, 4
        %v1002 = vmax.f32 %v1000, %v1001
        %v1003 = vrot.slane %v1002, 2
        %v1004 = vmax.f32 %v1002, %v1003
        %v1005 = vrot.slane %v1004, 1
        %v1006 = vmax.f32 %v1004, %v1005
        %vm1007 = vcmp.eq.f32.partialorder %v986, %v1006
        %vm1008 = vcmp.eq.f32.partialorder %v987, %v1006
        %vm1009 = vcmp.eq.f32.partialorder %v988, %v1006
        %vm1010 = vcmp.eq.f32.partialorder %v989, %v1006
        %vm1011 = vcmp.eq.f32.partialorder %v990, %v1006
        %vm1012 = vcmp.eq.f32.partialorder %v991, %v1006
        %vm1013 = vcmp.eq.f32.partialorder %v992, %v1006
        %vm1014 = vcmp.eq.f32.partialorder %v993, %v1006
        %v1015 = vsel %vm1007, %v313, 64
        %v1016 = vsel %vm1008, %v314, 64
        %v1017 = vsel %vm1009, %v315, 64
        %v1018 = vsel %vm1010, %v316, 64
        %v1019 = vsel %vm1011, %v317, 64
        %v1020 = vsel %vm1012, %v318, 64
        %v1021 = vsel %vm1013, %v319, 64
        %v1022 = vsel %vm1014, %v320, 64
        %vm1023 = vcmp.lt.s32.totalorder %v1015, %v1019
        %v1024 = vsel %vm1023, %v1015, %v1019
        %vm1025 = vcmp.lt.s32.totalorder %v1016, %v1020
        %v1026 = vsel %vm1025, %v1016, %v1020
        %vm1027 = vcmp.lt.s32.totalorder %v1017, %v1021
        %v1028 = vsel %vm1027, %v1017, %v1021
        %vm1029 = vcmp.lt.s32.totalorder %v1018, %v1022
        %v1030 = vsel %vm1029, %v1018, %v1022
        %vm1031 = vcmp.lt.s32.totalorder %v1024, %v1026
        %v1032 = vsel %vm1031, %v1024, %v1026
        %vm1033 = vcmp.lt.s32.totalorder %v1028, %v1030
        %v1034 = vsel %vm1033, %v1028, %v1030
        %vm1035 = vcmp.lt.s32.totalorder %v1032, %v1034
        %v1036 = vsel %vm1035, %v1032, %v1034
        %v1037 = vrot.slane %v1036, 4
        %vm1038 = vcmp.lt.s32.totalorder %v1036, %v1037
        %v1039 = vsel %vm1038, %v1036, %v1037
        %v1040 = vrot.slane %v1039, 2
        %vm1041 = vcmp.lt.s32.totalorder %v1039, %v1040
        %v1042 = vsel %vm1041, %v1039, %v1040
        %v1043 = vrot.slane %v1042, 1
        %vm1044 = vcmp.lt.s32.totalorder %v1042, %v1043
        %v1045 = vsel %vm1044, %v1042, %v1043
        %v1046 = vadd.f32 %v1006, %v323
        %s1047 = sadd.s32 %s420, 6
        %p1048 = scmp.lt.s32.totalorder %s1047, %s294
        %s1049 = scalar_select %p1048, 1, 0
        %v1050 = vstv %s1049
        %vm1051 = vcmp.eq.s32.totalorder %v1050, 1
        %v1053 = vrot.slane %v950, 7
        %v1055 = vsel %vm1051, %v1046, %v1053
        %v1056 = vlaneseq
        %v1057 = vshrl.u32 %v1056, 7
        %v1058 = vsub.s32 6, %v1057
        %v1059 = vrot.slane %v1055, %v1058
        %1061 = vbcast.lane.b32.xlu0 %v1059, 256
        %v1062 = vpop.permute.xlu0 %1061
        %s1064 = sor.u32 256, 8
        %1065 = vbcast.lane.b32.xlu0 %v1059, %s1064
        %v1066 = vpop.permute.xlu0 %1065
        %s1068 = sor.u32 256, 16
        %1069 = vbcast.lane.b32.xlu0 %v1059, %s1068
        %v1070 = vpop.permute.xlu0 %1069
        %s1072 = sor.u32 256, 24
        %1073 = vbcast.lane.b32.xlu0 %v1059, %s1072
        %v1074 = vpop.permute.xlu0 %1073
        %s1076 = sor.u32 256, 32
        %1077 = vbcast.lane.b32.xlu0 %v1059, %s1076
        %v1078 = vpop.permute.xlu0 %1077
        %s1080 = sor.u32 256, 40
        %1081 = vbcast.lane.b32.xlu0 %v1059, %s1080
        %v1082 = vpop.permute.xlu0 %1081
        %s1084 = sor.u32 256, 48
        %1085 = vbcast.lane.b32.xlu0 %v1059, %s1084
        %v1086 = vpop.permute.xlu0 %1085
        %s1088 = sor.u32 256, 56
        %1089 = vbcast.lane.b32.xlu0 %v1059, %s1088
        %v1090 = vpop.permute.xlu0 %1089
        %v1091 = vadd.f32 %v1062, %v304
        %v1092 = vadd.f32 %v1066, %v305
        %v1093 = vadd.f32 %v1070, %v306
        %v1094 = vadd.f32 %v1074, %v307
        %v1095 = vadd.f32 %v1078, %v308
        %v1096 = vadd.f32 %v1082, %v309
        %v1097 = vadd.f32 %v1086, %v310
        %v1098 = vadd.f32 %v1090, %v311
        %v1099 = vmax.f32 %v1091, %v1095
        %v1100 = vmax.f32 %v1092, %v1096
        %v1101 = vmax.f32 %v1093, %v1097
        %v1102 = vmax.f32 %v1094, %v1098
        %v1103 = vmax.f32 %v1099, %v1100
        %v1104 = vmax.f32 %v1101, %v1102
        %v1105 = vmax.f32 %v1103, %v1104
        %v1106 = vrot.slane %v1105, 4
        %v1107 = vmax.f32 %v1105, %v1106
        %v1108 = vrot.slane %v1107, 2
        %v1109 = vmax.f32 %v1107, %v1108
        %v1110 = vrot.slane %v1109, 1
        %v1111 = vmax.f32 %v1109, %v1110
        %vm1112 = vcmp.eq.f32.partialorder %v1091, %v1111
        %vm1113 = vcmp.eq.f32.partialorder %v1092, %v1111
        %vm1114 = vcmp.eq.f32.partialorder %v1093, %v1111
        %vm1115 = vcmp.eq.f32.partialorder %v1094, %v1111
        %vm1116 = vcmp.eq.f32.partialorder %v1095, %v1111
        %vm1117 = vcmp.eq.f32.partialorder %v1096, %v1111
        %vm1118 = vcmp.eq.f32.partialorder %v1097, %v1111
        %vm1119 = vcmp.eq.f32.partialorder %v1098, %v1111
        %v1120 = vsel %vm1112, %v313, 64
        %v1121 = vsel %vm1113, %v314, 64
        %v1122 = vsel %vm1114, %v315, 64
        %v1123 = vsel %vm1115, %v316, 64
        %v1124 = vsel %vm1116, %v317, 64
        %v1125 = vsel %vm1117, %v318, 64
        %v1126 = vsel %vm1118, %v319, 64
        %v1127 = vsel %vm1119, %v320, 64
        %vm1128 = vcmp.lt.s32.totalorder %v1120, %v1124
        %v1129 = vsel %vm1128, %v1120, %v1124
        %vm1130 = vcmp.lt.s32.totalorder %v1121, %v1125
        %v1131 = vsel %vm1130, %v1121, %v1125
        %vm1132 = vcmp.lt.s32.totalorder %v1122, %v1126
        %v1133 = vsel %vm1132, %v1122, %v1126
        %vm1134 = vcmp.lt.s32.totalorder %v1123, %v1127
        %v1135 = vsel %vm1134, %v1123, %v1127
        %vm1136 = vcmp.lt.s32.totalorder %v1129, %v1131
        %v1137 = vsel %vm1136, %v1129, %v1131
        %vm1138 = vcmp.lt.s32.totalorder %v1133, %v1135
        %v1139 = vsel %vm1138, %v1133, %v1135
        %vm1140 = vcmp.lt.s32.totalorder %v1137, %v1139
        %v1141 = vsel %vm1140, %v1137, %v1139
        %v1142 = vrot.slane %v1141, 4
        %vm1143 = vcmp.lt.s32.totalorder %v1141, %v1142
        %v1144 = vsel %vm1143, %v1141, %v1142
        %v1145 = vrot.slane %v1144, 2
        %vm1146 = vcmp.lt.s32.totalorder %v1144, %v1145
        %v1147 = vsel %vm1146, %v1144, %v1145
        %v1148 = vrot.slane %v1147, 1
        %vm1149 = vcmp.lt.s32.totalorder %v1147, %v1148
        %v1150 = vsel %vm1149, %v1147, %v1148
        %v1151 = vadd.f32 %v1111, %v323
        %s1152 = sadd.s32 %s420, 7
        %p1153 = scmp.lt.s32.totalorder %s1152, %s294
        %s1154 = scalar_select %p1153, 1, 0
        %v1155 = vstv %s1154
        %vm1156 = vcmp.eq.s32.totalorder %v1155, 1
        %v1158 = vrot.slane %v1055, 7
        %v1160 = vsel %vm1156, %v1151, %v1158
        %vm1161 = vcmask 1040384
        %v1162 = vsel %vm1161, %v418, %v520
        %vm1163 = vcmask 1041408
        %v1164 = vsel %vm1163, %v1162, %v625
        %vm1165 = vcmask 1042432
        %v1166 = vsel %vm1165, %v1164, %v730
        %vm1167 = vcmask 1043456
        %v1168 = vsel %vm1167, %v1166, %v835
        %vm1169 = vcmask 1044480
        %v1170 = vsel %vm1169, %v1168, %v940
        %vm1171 = vcmask 1045504
        %v1172 = vsel %vm1171, %v1170, %v1045
        %vm1173 = vcmask 1046528
        %v1174 = vsel %vm1173, %v1172, %v1150
        %1175 = vst [vmem:[%s277] sm:$0xff] %v1174
        %1176 = vst [vmem:[#allocation2 - $0x7] sm:$0x80] %v1160
        // Predicated region
        $region45: #{tpu_custom_call.1} parent=31 // pred_check
          %p1177 = pneg %p295
        $region46: #{tpu_custom_call.1} parent=31 // pred_check_branch
          %1179 = sbr.rel (%p1177) target = $region48
        $region47: #{tpu_custom_call.1} parent=31 // pred_region
          %v1180 = vld [vmem:[%s3] sm:$0x1]
          %v1182 = vlaneseq
          %v1183 = vshrl.u32 %v1182, 7
          %v1184 = vsub.s32 0, %v1183
          %v1185 = vrot.slane %v1180, %v1184
          %v1187 = vadd.f32 %v1160, %v1185
          %vm1188 = vcmask 1047559
          %v1189 = vsel %vm1188, %v1187, -inf
          %1190 = vmax.xlane.f32.xlu0 %v1189
          %v1191 = vpop.xlane.xlu0 %1190
          %v1192 = vlaneseq
          %v1193 = vand.u32 %v1192, 127
          %vm1194 = vcmp.eq.f32.partialorder %v1187, %v1191
          %v1195 = vsel %vm1194, %v1193, 128
          %v1196 = vsel %vm1188, %v1195, 2147483647
          %v1197 = vand.u32 %v1196, 65535
          %v1198 = vshra.s32 %v1196, 16
          %v1199 = vcvt.s32.f32 %v1197
          %v1200 = vcvt.s32.f32 %v1198
          %1201 = vmin.xlane.f32.xlu0 %v1200
          %v1202 = vpop.xlane.xlu0 %1201
          %vm1203 = vcmp.eq.f32.partialorder %v1200, %v1202
          %v1204 = vsel %vm1203, %v1199, inf
          %1205 = vmin.xlane.f32.xlu0 %v1204
          %v1206 = vpop.xlane.xlu0 %1205
          %v1207 = vcvt.f32.s32 %v1206
          %v1208 = vcvt.f32.s32 %v1202
          %v1209 = vshll.u32 %v1208, 16
          %v1210 = vadd.s32 %v1209, %v1207
          %vm1211 = vcmask 7175
          %1212 = vst.msk [vmem:[%s290 - $0x7] sm:$0x80] %vm1211, %v1191
          %1213 = vst.msk [vmem:[%s293 - $0x7] sm:$0x80] %vm1211, %v1210
        $region48: #{tpu_custom_call.1} parent=31 // pred_fallthru
          _
        %s1214 = sand.u32 %s121, 1
        %s1215 = scalar_lea.sflag [#allocation7], %s1214
        %s1216 = sand.u32 %s121, 1
        %s1217 = smul.addr %s1216, 8
        %s1218 = scalar_lea.vmem [#allocation10], %s1217
        %p1219 = scmp.lt.s32.totalorder %s33, 1
        %s1220 = scalar_select %p1219, %s33, 1
        %s1221 = scalar_lea.vmem %s5, %s1220
        %p1222 = scmp.lt.s32.totalorder %s33, 1
        %s1223 = scalar_select %p1222, %s33, 1
        %s1224 = scalar_lea.vmem %s6, %s1223
        // Predicated region
        $region49: #{tpu_custom_call.1} parent=31 // pred_check
          %p1225 = pneg %p131
        $region50: #{tpu_custom_call.1} parent=31 // pred_check_branch
          %1227 = sbr.rel (%p1225) target = $region52
        $region51: #{tpu_custom_call.1} parent=31 // pred_region
          %s1229 = ssub.s32 128, 128
          %1230 = vsyncadd %s1215, %s1229
          %s1231 = sadd.s32 %s34, %s33
          %s1232 = smul.addr %s1231, 128
          %s1233 = scalar_lea.hbm %s4, %s1232
          %s1235 = sshll.u32 %s1218, 4
          %s1236 = int_to_ptr.vmem [resolvable:$true] %s1235
          %1238 = dma.vmem_to_hbm [thread:$0]  %s1236, 128, %s1233, %s1215
        $region52: #{tpu_custom_call.1} parent=31 // pred_fallthru
          _
        // Predicated region
        $region53: #{tpu_custom_call.1} parent=31 // pred_check
          %p1239 = pneg %p157
        $region54: #{tpu_custom_call.1} parent=31 // pred_check_branch
          %1241 = sbr.rel (%p1239) target = $region56
        $region55: #{tpu_custom_call.1} parent=31 // pred_region
          _
        $region56: #{tpu_custom_call.1} parent=31 // pred_fallthru
          _
        // Predicated region
        $region57: #{tpu_custom_call.1} parent=31 // pred_check
          %p1242 = pneg %p183
        $region58: #{tpu_custom_call.1} parent=31 // pred_check_branch
          %1244 = sbr.rel (%p1242) target = $region60
        $region59: #{tpu_custom_call.1} parent=31 // pred_region
          _
        $region60: #{tpu_custom_call.1} parent=31 // pred_fallthru
          _
      $region32: #{tpu_custom_call.1} parent=5 // pred_fallthru
        _
      %p1245 = scmp.le.s32.totalorder 2, %s24
      // Predicated region
      $region61: #{tpu_custom_call.1} parent=5 // pred_check
        %p1246 = pneg %p1245
      $region62: #{tpu_custom_call.1} parent=5 // pred_check_branch
        %1248 = sbr.rel (%p1246) target = $region64
      $region63: #{tpu_custom_call.1} parent=5 // pred_region
        %s1249 = ssub.s32 %s24, 2
        // Predicated region
        $region65: #{tpu_custom_call.1} parent=63 // pred_check
          %p1250 = pneg %p137
        $region66: #{tpu_custom_call.1} parent=63 // pred_check_branch
          %1252 = sbr.rel (%p1250) target = $region68
        $region67: #{tpu_custom_call.1} parent=63 // pred_region
          %s1253 = sand.u32 %s122, 1
          %s1254 = scalar_lea.sflag [#allocation7], %s1253
          %s1255 = sand.u32 %s122, 1
          %s1256 = smul.addr %s1255, 8
          %s1257 = scalar_lea.vmem [#allocation10], %s1256
          %1258 = dma.done %s1254, 128
        $region68: #{tpu_custom_call.1} parent=63 // pred_fallthru
          _
        // Predicated region
        $region69: #{tpu_custom_call.1} parent=63 // pred_check
          %p1259 = pneg %p163
        $region70: #{tpu_custom_call.1} parent=63 // pred_check_branch
          %1261 = sbr.rel (%p1259) target = $region72
        $region71: #{tpu_custom_call.1} parent=63 // pred_region
          %p1262 = scmp.lt.s32.totalorder %s35, 1
          %s1263 = scalar_select %p1262, %s35, 1
          %s1264 = scalar_lea.vmem %s5, %s1263
        $region72: #{tpu_custom_call.1} parent=63 // pred_fallthru
          _
        // Predicated region
        $region73: #{tpu_custom_call.1} parent=63 // pred_check
          %p1265 = pneg %p189
        $region74: #{tpu_custom_call.1} parent=63 // pred_check_branch
          %1267 = sbr.rel (%p1265) target = $region76
        $region75: #{tpu_custom_call.1} parent=63 // pred_region
          %p1268 = scmp.lt.s32.totalorder %s35, 1
          %s1269 = scalar_select %p1268, %s35, 1
          %s1270 = scalar_lea.vmem %s6, %s1269
        $region76: #{tpu_custom_call.1} parent=63 // pred_fallthru
          _
      $region64: #{tpu_custom_call.1} parent=5 // pred_fallthru
        _
    $region6: #{tpu_custom_call.1} parent=1 // loop_footer
      %s28 = sadd.s32 1, %s24
    $region7: #{tpu_custom_call.1} parent=1 // loop_footer_branch
      %23 = sbr.rel target = $region3
    $region8: #{tpu_custom_call.1} parent=1 // loop_exit
      _
    %1271 = vsyncpa [#allocation6], 1
    %s1272 = scalar_lea.sflag [#allocation6], 1
    %1273 = vsyncpa %s1272, 1
    %1274 = vsyncpa [#allocation9], 1
    %1275 = vsyncpa [#allocation7], 1
    %s1276 = scalar_lea.sflag [#allocation7], 1
    %1277 = vsyncpa %s1276, 1

</llo_original>
